<compile_context>
chip_gen: v7x
topology: tpu7x:2x2x1
jax: 0.10.0
libtpu: 0.0.40
codegen_flags: <defaults>
</compile_context>

<pallas_src>
import jax
import jax.numpy as jnp
from jax.experimental import pallas as pl
from jax.experimental.pallas import tpu as pltpu

F32 = jnp.float32

# ---------------- hyper-parameters (small, deterministic) -------------------
KT = 3                                   # temporal kernel size (args.Kt)
KS = 3                                   # Chebyshev order       (args.Ks)
N_HIS = 8                                # input time steps      (args.n_his)
N_VERTEX = 16                            # graph vertices
BATCH = 2
BLOCKS = [[1], [8, 4, 8], [16, 16], [1]]          # 1 ST block
KO = N_HIS - (len(BLOCKS) - 3) * 2 * (KT - 1)     # = 4 (> 1 -> OutputBlock)
LN_EPS = 1e-5                            # torch.nn.LayerNorm default eps

C0, C1, C2 = BLOCKS[1]                   # 8, 4, 8
OC0, OC1 = BLOCKS[-2]                    # 16, 16
END_CH = BLOCKS[-1][0]                   # 1

NV = N_VERTEX                            # rows per time step within one batch
T1 = N_HIS - KT + 1                      # 6
T2 = T1 - KT + 1                         # 4
T3 = T2 - KO + 1                         # 1
M0B, M1B, M2B, M3B = N_HIS * NV, T1 * NV, T2 * NV, T3 * NV   # per-batch rows
assert KO > 1 and T3 == 1


def _pick_matmul_dtype():
    # bf16 operands feed the v6e/v7x MXU at native rate (f32 is multi-pass);
    # accumulation stays f32 via preferred_element_type.  v5e/unknown -> f32.
    try:
        kind = jax.devices()[0].device_kind.lower()
        if any(tag in kind for tag in ("v6", "v7", "tpu7")):
            return jnp.bfloat16
    except Exception:
        pass
    return jnp.float32


MATMUL_DTYPE = _pick_matmul_dtype()

# ---------------- packed weight-slab layout (static row offsets) ------------
SLAB_W = 2 * OC0                         # 32 lanes, max channel width needed


def _build_slab_layout():
    layout, row = {}, 0

    def add(name, r, c):
        nonlocal row
        assert c <= SLAB_W
        layout[name] = (row, r, c)
        row += -(-r // 8) * 8            # 8-align each region (sublane tiles)

    add("w1", KT * C0, 2 * C0); add("b1", 1, 2 * C0)
    add("wa", C0, C1);          add("ba", 1, C1)
    add("cw", KS * C1, C1);     add("cb", 1, C1)
    add("w2", KT * C1, 2 * C2); add("b2", 1, 2 * C2)
    add("ln1_g", NV, C2);       add("ln1_b", NV, C2)
    add("w3", KO * C2, 2 * OC0); add("b3", 1, 2 * OC0)
    add("ln2_g", NV, OC0);      add("ln2_b", NV, OC0)
    add("fc1w", OC0, OC1);      add("fc1b", 1, OC1)
    add("fc2w", OC1, END_CH);   add("fc2b", 1, END_CH)
    return layout, row


SLAB_LAYOUT, SLAB_ROWS = _build_slab_layout()


# --------------------------- fused Pallas kernel -----------------------------
def _stgcn_fused_kernel(x_ref, gso_ref, w_ref, out_ref):
    """One batch element per grid step; every activation stays in VMEM."""

    def getw(name):
        off, r, c = SLAB_LAYOUT[name]
        return w_ref[off:off + r, :c]

    def mm(a, b):                       # MXU matmul, f32 accumulate
        return jnp.dot(a.astype(MATMUL_DTYPE), b.astype(MATMUL_DTYPE),
                       preferred_element_type=jnp.float32)

    def chan_pad(a, c_out):             # Align with c_in < c_out: zero lane pad
        c_in = a.shape[-1]
        if c_in == c_out:
            return a
        return jnp.concatenate(
            [a, jnp.zeros((a.shape[0], c_out - c_in), jnp.float32)], axis=-1)

    def temporal_glu(x, w_name, b_name, kt, c_out, m_out, x_in):
        # causal conv over time: kt row-shifted slices stacked on lanes -> ONE
        # matmul producing merged p|q; GLU gate fused.
        xt = jnp.concatenate(
            [x[k * NV:k * NV + m_out, :] for k in range(kt)], axis=-1)
        pq = mm(xt, getw(w_name)) + getw(b_name)          # (m_out, 2*c_out)
        return (pq[:, :c_out] + x_in) * jax.nn.sigmoid(pq[:, c_out:])

    def layer_norm(a, groups, c, g_name, b_name):
        # per-(batch,time) LayerNorm over (n_vertex, channels): stats via direct
        # lane + sublane reductions on the grouped 3-D view (no ones-matmuls).
        xr = a.reshape(groups, NV, c)
        inv = 1.0 / (NV * c)
        mu = jnp.sum(jnp.sum(xr, axis=-1, keepdims=True),
                     axis=-2, keepdims=True) * inv
        d = xr - mu
        var = jnp.sum(jnp.sum(d * d, axis=-1, keepdims=True),
                      axis=-2, keepdims=True) * inv
        y = d * jax.lax.rsqrt(var + LN_EPS) * getw(g_name)[None] \
            + getw(b_name)[None]
        return y.reshape(groups * NV, c)

    x0 = x_ref[0]                                         # (M0B, C0), chan zero-padded

    # ---- STConvBlock: temporal GLU conv 1 (Align(1->C0) folded into pad) ----
    h1 = temporal_glu(x0, "w1", "b1", KT, C0, M1B,
                      x0[(KT - 1) * NV:(KT - 1) * NV + M1B, :])

    # ---- graph conv: Align(C0->C1) 1x1 conv, Chebyshev recurrence with a
    #      batched (per time slab) 16x16 gso einsum, stacked-term contraction,
    #      residual add + ReLU ----
    xg = mm(h1, getw("wa")) + getw("ba")                  # (M1B, C1)
    xg3 = xg.reshape(T1, NV, C1)
    gso_b = jnp.broadcast_to(gso_ref[...], (T1, NV, NV))  # hoisted once
    terms = [xg3]
    x_prev2, x_prev1 = xg3, xg3
    if KS >= 2:
        x_prev1 = jnp.einsum("gni,gic->gnc", gso_b, xg3,
                             preferred_element_type=jnp.float32)
        terms.append(x_prev1)
    for _ in range(2, KS):
        x_k = 2.0 * jnp.einsum("gni,gic->gnc", gso_b, x_prev1,
                               preferred_element_type=jnp.float32) - x_prev2
        terms.append(x_k)
        x_prev2, x_prev1 = x_prev1, x_k
    cheb = jnp.concatenate(terms, axis=-1).reshape(M1B, KS * C1)
    hg = jnp.maximum(mm(cheb, getw("cw")) + getw("cb") + xg, 0.0)

    # ---- temporal GLU conv 2 (Align(C1->C2) zero pad), LayerNorm (dropout=id) ----
    h2 = temporal_glu(hg, "w2", "b2", KT, C2, M2B,
                      chan_pad(hg[(KT - 1) * NV:(KT - 1) * NV + M2B, :], C2))
    h2 = layer_norm(h2, T2, C2, "ln1_g", "ln1_b")

    # ---- OutputBlock: temporal GLU (Ko), LayerNorm, FC1+ReLU, FC2 ----
    h3 = temporal_glu(h2, "w3", "b3", KO, OC0, M3B,
                      chan_pad(h2[(KO - 1) * NV:(KO - 1) * NV + M3B, :], OC0))
    h3 = layer_norm(h3, T3, OC0, "ln2_g", "ln2_b")
    h4 = jnp.maximum(mm(h3, getw("fc1w")) + getw("fc1b"), 0.0)
    out_ref[0] = (mm(h4, getw("fc2w")) + getw("fc2b")).astype(out_ref.dtype)


# ------------------------- pallas_call wrapper --------------------------------
def _fused_pallas_call(x, gso, wslab):
    # Only 3 input operands (x, gso, packed weight slab) + 1 output; batch is a
    # "parallel" grid axis so v7x's two TensorCores split it (v5e/v6e just loop;
    # constant-index weight blocks are not re-fetched between steps).
    # NOTE(scaling): for larger T*N, add a row-tiled grid axis and budget block
    # sizes against v7x's 64 MiB VMEM via CompilerParams(vmem_limit_bytes=...).
    return pl.pallas_call(
        _stgcn_fused_kernel,
        out_shape=jax.ShapeDtypeStruct((BATCH, M3B, END_CH), F32),
        grid=(BATCH,),
        in_specs=[
            pl.BlockSpec((1, M0B, C0), lambda b: (b, 0, 0)),
            pl.BlockSpec((NV, NV), lambda b: (0, 0)),
            pl.BlockSpec((SLAB_ROWS, SLAB_W), lambda b: (0, 0)),
        ],
        out_specs=pl.BlockSpec((1, M3B, END_CH), lambda b: (b, 0, 0)),
        compiler_params=pltpu.CompilerParams(dimension_semantics=("parallel",)),
    )(x, gso, wslab)


# --------------------- one-time parameter re-layout ---------------------------
def prepare_inputs(p):
    """Pack every weight/bias/LN param into one f32 slab (outside jit, once)."""

    def glu_weight(w, b, c_in_pad=None):
        # torch Conv2d weight (2*c_out, c_in, kt) -> (kt*c_in, 2*c_out) with
        # row index k*c_in + i, matching the lane-stacked taps in the kernel.
        c2 = w.shape[0]
        kt = w.shape[2]
        wt = jnp.transpose(w.astype(F32), (2, 1, 0))      # (kt, c_in, 2*c_out)
        if c_in_pad is not None and wt.shape[1] < c_in_pad:
            wt = jnp.concatenate(
                [wt, jnp.zeros((kt, c_in_pad - wt.shape[1], c2), F32)], axis=1)
        return wt.reshape(kt * wt.shape[1], c2), b.astype(F32).reshape(1, c2)

    w1, b1 = glu_weight(p["tc1_w"], p["tc1_b"], c_in_pad=C0)  # Align(1->C0) folded
    w2, b2 = glu_weight(p["tc2_w"], p["tc2_b"])
    w3, b3 = glu_weight(p["out_tc_w"], p["out_tc_b"])

    entries = {
        "w1": w1, "b1": b1,
        "wa": jnp.transpose(p["gc_align_w"].astype(F32)),     # (C0, C1)
        "ba": p["gc_align_b"].astype(F32).reshape(1, C1),
        "cw": p["cheb_w"].astype(F32).reshape(KS * C1, C1),   # row = k*C1 + i
        "cb": p["cheb_b"].astype(F32).reshape(1, C1),
        "w2": w2, "b2": b2,
        "ln1_g": p["ln1_g"].astype(F32), "ln1_b": p["ln1_b"].astype(F32),
        "w3": w3, "b3": b3,
        "ln2_g": p["ln2_g"].astype(F32), "ln2_b": p["ln2_b"].astype(F32),
        "fc1w": jnp.transpose(p["fc1_w"].astype(F32)),        # (OC0, OC1)
        "fc1b": p["fc1_b"].astype(F32).reshape(1, OC1),
        "fc2w": jnp.transpose(p["fc2_w"].astype(F32)),        # (OC1, END_CH)
        "fc2b": p["fc2_b"].astype(F32).reshape(1, END_CH),
    }
    slab = jnp.zeros((SLAB_ROWS, SLAB_W), F32)
    for name, arr in entries.items():
        off, r, c = SLAB_LAYOUT[name]
        assert arr.shape == (r, c), (name, arr.shape, (r, c))
        slab = slab.at[off:off + r, :c].set(arr)
    return p["gso"].astype(F32), slab


# ---------------------------- full forward -----------------------------------
def stgcn_forward(x_nchw, gso, wslab):
    """x_nchw: (B, c_in, n_his, n_vertex) -> (B, end_channel, 1, n_vertex)."""
    b, cin, t, n = x_nchw.shape
    # per-batch channel-last rows: row = t*n_vertex + n  (tiny XLA relayout)
    x = jnp.transpose(x_nchw.astype(F32), (0, 2, 3, 1)).reshape(b, t * n, cin)
    if cin < C0:   # Align(c_in -> C0) zero-pad, shared with the folded conv weight
        x = jnp.concatenate([x, jnp.zeros((b, t * n, C0 - cin), F32)], axis=-1)
    out = _fused_pallas_call(x, gso, wslab)               # (B, T3*NV, END_CH)
    out = out.reshape(b, T3, N_VERTEX, END_CH)
    return jnp.transpose(out, (0, 3, 1, 2))               # (B, end_ch, 1, n_vertex)


# --------------------- pure-JAX reference (validation) ------------------------
def stgcn_reference(x_nchw, p):
    """Plain-XLA forward mirroring the PyTorch module semantics (f32)."""
    x = x_nchw.astype(F32)

    def align(x, c_out, w=None, b=None):
        c_in = x.shape[1]
        if c_in > c_out:                                   # 1x1 conv
            return jnp.einsum("bitn,oi->botn", x, w) + b[None, :, None, None]
        if c_in < c_out:                                   # zero-pad channels
            z = jnp.zeros((x.shape[0], c_out - c_in) + x.shape[2:], F32)
            return jnp.concatenate([x, z], axis=1)
        return x

    def temporal_glu(x, w, b, c_out):
        kt = w.shape[2]
        x_in = align(x, c_out)[:, :, kt - 1:, :]
        t_out = x.shape[2] - kt + 1
        conv = b[None, :, None, None]
        for k in range(kt):
            conv = conv + jnp.einsum("bitn,oi->botn",
                                     x[:, :, k:k + t_out, :], w[:, :, k])
        return (conv[:, :c_out] + x_in) * jax.nn.sigmoid(conv[:, c_out:])

    def layer_norm(xbtnc, g, beta):
        mu = jnp.mean(xbtnc, axis=(2, 3), keepdims=True)
        var = jnp.mean(jnp.square(xbtnc - mu), axis=(2, 3), keepdims=True)
        return (xbtnc - mu) * jax.lax.rsqrt(var + LN_EPS) * g + beta

    # ---- STConvBlock ----
    x = temporal_glu(x, p["tc1_w"].astype(F32), p["tc1_b"].astype(F32), C0)
    x_gc_in = align(x, C1, p["gc_align_w"].astype(F32), p["gc_align_b"].astype(F32))
    xp = jnp.transpose(x_gc_in, (0, 2, 3, 1))
    xl = [xp]
    if KS >= 2:
        xl.append(jnp.einsum("hi,btij->bthj", p["gso"].astype(F32), xp))
    for _ in range(2, KS):
        xl.append(2.0 * jnp.einsum("hi,btij->bthj", p["gso"].astype(F32), xl[-1])
                  - xl[-2])
    x_gc = jnp.einsum("btkhi,kij->bthj", jnp.stack(xl, axis=2),
                      p["cheb_w"].astype(F32)) + p["cheb_b"].astype(F32)
    x = jax.nn.relu(jnp.transpose(x_gc, (0, 3, 1, 2)) + x_gc_in)
    x = temporal_glu(x, p["tc2_w"].astype(F32), p["tc2_b"].astype(F32), C2)
    x = layer_norm(jnp.transpose(x, (0, 2, 3, 1)),
                   p["ln1_g"].astype(F32), p["ln1_b"].astype(F32))
    x = jnp.transpose(x, (0, 3, 1, 2))
    # ---- OutputBlock ----
    x = temporal_glu(x, p["out_tc_w"].astype(F32), p["out_tc_b"].astype(F32), OC0)
    x = layer_norm(jnp.transpose(x, (0, 2, 3, 1)),
                   p["ln2_g"].astype(F32), p["ln2_b"].astype(F32))
    x = jax.nn.relu(x @ p["fc1_w"].astype(F32).T + p["fc1_b"].astype(F32))
    x = x @ p["fc2_w"].astype(F32).T + p["fc2_b"].astype(F32)
    return jnp.transpose(x, (0, 3, 1, 2))


# ---------------------------- parameters -------------------------------------
def init_params(key):
    ks = jax.random.split(key, 16)

    def rnd(k, shape, scale=0.1):
        return scale * jax.random.normal(k, shape, F32)

    gso = rnd(ks[0], (N_VERTEX, N_VERTEX), 0.2)
    gso = 0.5 * (gso + gso.T)                 # symmetric "scaled Laplacian"-like GSO

    return {
        "gso": gso,
        # ST block
        "tc1_w": rnd(ks[1], (2 * C0, BLOCKS[0][0], KT)),
        "tc1_b": rnd(ks[2], (2 * C0,)),
        "gc_align_w": rnd(ks[3], (C1, C0)),
        "gc_align_b": rnd(ks[4], (C1,)),
        "cheb_w": rnd(ks[5], (KS, C1, C1)),
        "cheb_b": rnd(ks[6], (C1,)),
        "tc2_w": rnd(ks[7], (2 * C2, C1, KT)),
        "tc2_b": rnd(ks[8], (2 * C2,)),
        "ln1_g": jnp.ones((N_VERTEX, C2), F32),
        "ln1_b": jnp.zeros((N_VERTEX, C2), F32),
        # Output block
        "out_tc_w": rnd(ks[9], (2 * OC0, C2, KO)),
        "out_tc_b": rnd(ks[10], (2 * OC0,)),
        "ln2_g": jnp.ones((N_VERTEX, OC0), F32),
        "ln2_b": jnp.zeros((N_VERTEX, OC0), F32),
        "fc1_w": rnd(ks[11], (OC1, OC0)),
        "fc1_b": rnd(ks[12], (OC1,)),
        "fc2_w": rnd(ks[13], (END_CH, OC1)),
        "fc2_b": rnd(ks[14], (END_CH,)),
    }


# ------------------------------- main -----------------------------------------
if __name__ == "__main__":
    key = jax.random.PRNGKey(0)
    k_x, k_p = jax.random.split(key)
    x = jax.random.normal(k_x, (BATCH, BLOCKS[0][0], N_HIS, N_VERTEX), F32)
    params = init_params(k_p)
    gso, wslab = prepare_inputs(params)       # one-time weight packing (outside jit)

    fwd = jax.jit(stgcn_forward)
    out = jax.block_until_ready(fwd(x, gso, wslab))

    assert out.shape == (BATCH, END_CH, 1, N_VERTEX), out.shape
    assert bool(jnp.all(jnp.isfinite(out)))

    # Sanity check vs a pure-JAX reference (loose tolerance covers the bf16
    # matmul path on v6e/v7x and XLA's default f32 matmul precision).
    ref = stgcn_reference(x, params)
    err = float(jnp.max(jnp.abs(out - ref)))
    assert err < 5e-2, f"max abs err vs reference: {err}"

    print("KERNEL_OK")
</pallas_src>

<mosaic_0001>
module attributes {stable_mosaic.version = 11 : i64} {
  func.func @_stgcn_fused_kernel(%arg0: i32, %arg1: memref<1x128x8xf32, #tpu.memory_space<vmem>>, %arg2: memref<16x16xf32, #tpu.memory_space<vmem>>, %arg3: memref<248x32xf32, #tpu.memory_space<vmem>>, %arg4: memref<1x16x1xf32, #tpu.memory_space<vmem>>) attributes {dimension_semantics = [#tpu.dimension_semantics<parallel>], iteration_bounds = array<i64: 2>, scalar_prefetch = 0 : i64, scratch_operands = 0 : i64, tpu.core_type = #tpu.core_type<tc>, window_params = [{transform_indices = @transform_0, window_bounds = array<i64: 1, 128, 8>}, {pipeline_mode = #tpu.pipeline_mode<synchronous>, transform_indices = @transform_1, window_bounds = array<i64: 16, 16>}, {pipeline_mode = #tpu.pipeline_mode<synchronous>, transform_indices = @transform_2, window_bounds = array<i64: 248, 32>}, {transform_indices = @transform_3, window_bounds = array<i64: 1, 16, 1>}]} {
    %c0 = arith.constant 0 : index
    %c0_0 = arith.constant 0 : index
    %c0_1 = arith.constant 0 : index
    %0 = vector.load %arg1[%c0, %c0_0, %c0_1] : memref<1x128x8xf32, #tpu.memory_space<vmem>>, vector<1x128x8xf32>
    %1 = vector.shape_cast %0 : vector<1x128x8xf32> to vector<128x8xf32>
    %2 = vector.extract_strided_slice %1 {offsets = [32, 0], sizes = [96, 8], strides = [1, 1]} : vector<128x8xf32> to vector<96x8xf32>
    %3 = vector.extract_strided_slice %1 {offsets = [0, 0], sizes = [96, 8], strides = [1, 1]} : vector<128x8xf32> to vector<96x8xf32>
    %4 = vector.extract_strided_slice %1 {offsets = [16, 0], sizes = [96, 8], strides = [1, 1]} : vector<128x8xf32> to vector<96x8xf32>
    %5 = vector.extract_strided_slice %1 {offsets = [32, 0], sizes = [96, 8], strides = [1, 1]} : vector<128x8xf32> to vector<96x8xf32>
    %6 = tpu.concatenate %3, %4, %5 in 1 : vector<96x8xf32>, vector<96x8xf32>, vector<96x8xf32> -> vector<96x24xf32>
    %c0_2 = arith.constant 0 : index
    %c0_3 = arith.constant 0 : index
    %7 = vector.load %arg3[%c0_2, %c0_3] : memref<248x32xf32, #tpu.memory_space<vmem>>, vector<24x16xf32>
    %cst = arith.constant dense<0.000000e+00> : vector<96x16xf32>
    %8 = tpu.matmul %6, %7, %cst {dimension_numbers = #tpu.dot_dimension_numbers<[1], [0], [0], [1], [0, 0, 1, 1], [], []>} : vector<96x24xf32>, vector<24x16xf32>, vector<96x16xf32> -> vector<96x16xf32>
    %c24 = arith.constant 24 : index
    %c0_4 = arith.constant 0 : index
    %9 = vector.load %arg3[%c24, %c0_4] : memref<248x32xf32, #tpu.memory_space<vmem>>, vector<1x16xf32>
    %10 = vector.broadcast %9 : vector<1x16xf32> to vector<96x16xf32>
    %11 = arith.addf %8, %10 : vector<96x16xf32>
    %12 = vector.extract_strided_slice %11 {offsets = [0, 0], sizes = [96, 8], strides = [1, 1]} : vector<96x16xf32> to vector<96x8xf32>
    %13 = arith.addf %12, %2 : vector<96x8xf32>
    %14 = vector.extract_strided_slice %11 {offsets = [0, 8], sizes = [96, 8], strides = [1, 1]} : vector<96x16xf32> to vector<96x8xf32>
    %15 = arith.negf %14 : vector<96x8xf32>
    %16 = math.exp %15 : vector<96x8xf32>
    %cst_5 = arith.constant 1.000000e+00 : f32
    %17 = vector.broadcast %cst_5 : f32 to vector<96x8xf32>
    %18 = arith.addf %17, %16 : vector<96x8xf32>
    %19 = arith.divf %17, %18 : vector<96x8xf32>
    %20 = arith.mulf %13, %19 : vector<96x8xf32>
    %c32 = arith.constant 32 : index
    %c0_6 = arith.constant 0 : index
    %21 = vector.load %arg3[%c32, %c0_6] : memref<248x32xf32, #tpu.memory_space<vmem>>, vector<8x4xf32>
    %cst_7 = arith.constant dense<0.000000e+00> : vector<96x4xf32>
    %22 = tpu.matmul %20, %21, %cst_7 {dimension_numbers = #tpu.dot_dimension_numbers<[1], [0], [0], [1], [0, 0, 1, 1], [], []>} : vector<96x8xf32>, vector<8x4xf32>, vector<96x4xf32> -> vector<96x4xf32>
    %c40 = arith.constant 40 : index
    %c0_8 = arith.constant 0 : index
    %23 = vector.load %arg3[%c40, %c0_8] : memref<248x32xf32, #tpu.memory_space<vmem>>, vector<1x4xf32>
    %24 = vector.broadcast %23 : vector<1x4xf32> to vector<96x4xf32>
    %25 = arith.addf %22, %24 : vector<96x4xf32>
    %26 = vector.shape_cast %25 : vector<96x4xf32> to vector<6x16x4xf32>
    %c0_9 = arith.constant 0 : index
    %c0_10 = arith.constant 0 : index
    %27 = vector.load %arg2[%c0_9, %c0_10] : memref<16x16xf32, #tpu.memory_space<vmem>>, vector<16x16xf32>
    %28 = vector.shape_cast %27 : vector<16x16xf32> to vector<1x16x16xf32>
    %29 = vector.broadcast %28 : vector<1x16x16xf32> to vector<6x16x16xf32>
    "tpu.trace_start"() <{level = 10 : i32, message = "gni,gic->gnc"}> : () -> ()
    %cst_11 = arith.constant dense<0.000000e+00> : vector<6x16x4xf32>
    %30 = tpu.matmul %29, %26, %cst_11 {dimension_numbers = #tpu.dot_dimension_numbers<[2], [1], [1], [2], [0, 0, 0, 1, 1, 2], [0], [0]>} : vector<6x16x16xf32>, vector<6x16x4xf32>, vector<6x16x4xf32> -> vector<6x16x4xf32>
    %cst_12 = arith.constant dense<0.000000e+00> : vector<6x16x4xf32>
    %31 = tpu.matmul %29, %30, %cst_12 {dimension_numbers = #tpu.dot_dimension_numbers<[2], [1], [1], [2], [0, 0, 0, 1, 1, 2], [0], [0]>} : vector<6x16x16xf32>, vector<6x16x4xf32>, vector<6x16x4xf32> -> vector<6x16x4xf32>
    "tpu.trace_stop"() : () -> ()
    %cst_13 = arith.constant 2.000000e+00 : f32
    %32 = vector.broadcast %cst_13 : f32 to vector<6x16x4xf32>
    %33 = arith.mulf %32, %31 : vector<6x16x4xf32>
    %34 = arith.subf %33, %26 : vector<6x16x4xf32>
    %35 = tpu.concatenate %26, %30, %34 in 2 : vector<6x16x4xf32>, vector<6x16x4xf32>, vector<6x16x4xf32> -> vector<6x16x12xf32>
    %36 = vector.shape_cast %35 : vector<6x16x12xf32> to vector<96x12xf32>
    %c48 = arith.constant 48 : index
    %c0_14 = arith.constant 0 : index
    %37 = vector.load %arg3[%c48, %c0_14] : memref<248x32xf32, #tpu.memory_space<vmem>>, vector<12x4xf32>
    %cst_15 = arith.constant dense<0.000000e+00> : vector<96x4xf32>
    %38 = tpu.matmul %36, %37, %cst_15 {dimension_numbers = #tpu.dot_dimension_numbers<[1], [0], [0], [1], [0, 0, 1, 1], [], []>} : vector<96x12xf32>, vector<12x4xf32>, vector<96x4xf32> -> vector<96x4xf32>
    %c64 = arith.constant 64 : index
    %c0_16 = arith.constant 0 : index
    %39 = vector.load %arg3[%c64, %c0_16] : memref<248x32xf32, #tpu.memory_space<vmem>>, vector<1x4xf32>
    %40 = vector.broadcast %39 : vector<1x4xf32> to vector<96x4xf32>
    %41 = arith.addf %38, %40 : vector<96x4xf32>
    %42 = arith.addf %41, %25 : vector<96x4xf32>
    %cst_17 = arith.constant 0.000000e+00 : f32
    %43 = vector.broadcast %cst_17 : f32 to vector<96x4xf32>
    %44 = arith.maximumf %42, %43 : vector<96x4xf32>
    %45 = vector.extract_strided_slice %44 {offsets = [32, 0], sizes = [64, 4], strides = [1, 1]} : vector<96x4xf32> to vector<64x4xf32>
    %cst_18 = arith.constant 0.000000e+00 : f32
    %46 = vector.broadcast %cst_18 : f32 to vector<64x4xf32>
    %47 = tpu.concatenate %45, %46 in 1 : vector<64x4xf32>, vector<64x4xf32> -> vector<64x8xf32>
    %48 = vector.extract_strided_slice %44 {offsets = [0, 0], sizes = [64, 4], strides = [1, 1]} : vector<96x4xf32> to vector<64x4xf32>
    %49 = vector.extract_strided_slice %44 {offsets = [16, 0], sizes = [64, 4], strides = [1, 1]} : vector<96x4xf32> to vector<64x4xf32>
    %50 = vector.extract_strided_slice %44 {offsets = [32, 0], sizes = [64, 4], strides = [1, 1]} : vector<96x4xf32> to vector<64x4xf32>
    %51 = tpu.concatenate %48, %49, %50 in 1 : vector<64x4xf32>, vector<64x4xf32>, vector<64x4xf32> -> vector<64x12xf32>
    %c72 = arith.constant 72 : index
    %c0_19 = arith.constant 0 : index
    %52 = vector.load %arg3[%c72, %c0_19] : memref<248x32xf32, #tpu.memory_space<vmem>>, vector<12x16xf32>
    %cst_20 = arith.constant dense<0.000000e+00> : vector<64x16xf32>
    %53 = tpu.matmul %51, %52, %cst_20 {dimension_numbers = #tpu.dot_dimension_numbers<[1], [0], [0], [1], [0, 0, 1, 1], [], []>} : vector<64x12xf32>, vector<12x16xf32>, vector<64x16xf32> -> vector<64x16xf32>
    %c88 = arith.constant 88 : index
    %c0_21 = arith.constant 0 : index
    %54 = vector.load %arg3[%c88, %c0_21] : memref<248x32xf32, #tpu.memory_space<vmem>>, vector<1x16xf32>
    %55 = vector.broadcast %54 : vector<1x16xf32> to vector<64x16xf32>
    %56 = arith.addf %53, %55 : vector<64x16xf32>
    %57 = vector.extract_strided_slice %56 {offsets = [0, 0], sizes = [64, 8], strides = [1, 1]} : vector<64x16xf32> to vector<64x8xf32>
    %58 = arith.addf %57, %47 : vector<64x8xf32>
    %59 = vector.extract_strided_slice %56 {offsets = [0, 8], sizes = [64, 8], strides = [1, 1]} : vector<64x16xf32> to vector<64x8xf32>
    %60 = arith.negf %59 : vector<64x8xf32>
    %61 = math.exp %60 : vector<64x8xf32>
    %cst_22 = arith.constant 1.000000e+00 : f32
    %62 = vector.broadcast %cst_22 : f32 to vector<64x8xf32>
    %63 = arith.addf %62, %61 : vector<64x8xf32>
    %64 = arith.divf %62, %63 : vector<64x8xf32>
    %65 = arith.mulf %58, %64 : vector<64x8xf32>
    %66 = vector.shape_cast %65 : vector<64x8xf32> to vector<4x16x8xf32>
    %cst_23 = arith.constant dense<0.000000e+00> : vector<4x16xf32>
    %67 = vector.multi_reduction <add>, %66, %cst_23 [2] : vector<4x16x8xf32> to vector<4x16xf32>
    %68 = vector.shape_cast %67 : vector<4x16xf32> to vector<4x16x1xf32>
    %cst_24 = arith.constant dense<0.000000e+00> : vector<4x1xf32>
    %69 = vector.multi_reduction <add>, %68, %cst_24 [1] : vector<4x16x1xf32> to vector<4x1xf32>
    %70 = vector.shape_cast %69 : vector<4x1xf32> to vector<4x1x1xf32>
    %cst_25 = arith.constant 7.812500e-03 : f32
    %71 = vector.broadcast %cst_25 : f32 to vector<4x1x1xf32>
    %72 = arith.mulf %70, %71 : vector<4x1x1xf32>
    %73 = vector.broadcast %72 : vector<4x1x1xf32> to vector<4x16x8xf32>
    %74 = arith.subf %66, %73 : vector<4x16x8xf32>
    %75 = arith.mulf %74, %74 : vector<4x16x8xf32>
    %cst_26 = arith.constant dense<0.000000e+00> : vector<4x16xf32>
    %76 = vector.multi_reduction <add>, %75, %cst_26 [2] : vector<4x16x8xf32> to vector<4x16xf32>
    %77 = vector.shape_cast %76 : vector<4x16xf32> to vector<4x16x1xf32>
    %cst_27 = arith.constant dense<0.000000e+00> : vector<4x1xf32>
    %78 = vector.multi_reduction <add>, %77, %cst_27 [1] : vector<4x16x1xf32> to vector<4x1xf32>
    %79 = vector.shape_cast %78 : vector<4x1xf32> to vector<4x1x1xf32>
    %cst_28 = arith.constant 7.812500e-03 : f32
    %80 = vector.broadcast %cst_28 : f32 to vector<4x1x1xf32>
    %81 = arith.mulf %79, %80 : vector<4x1x1xf32>
    %cst_29 = arith.constant 9.99999974E-6 : f32
    %82 = vector.broadcast %cst_29 : f32 to vector<4x1x1xf32>
    %83 = arith.addf %81, %82 : vector<4x1x1xf32>
    %84 = math.rsqrt %83 : vector<4x1x1xf32>
    %85 = vector.broadcast %84 : vector<4x1x1xf32> to vector<4x16x8xf32>
    %86 = arith.mulf %74, %85 : vector<4x16x8xf32>
    %c96 = arith.constant 96 : index
    %c0_30 = arith.constant 0 : index
    %87 = vector.load %arg3[%c96, %c0_30] : memref<248x32xf32, #tpu.memory_space<vmem>>, vector<16x8xf32>
    %88 = vector.shape_cast %87 : vector<16x8xf32> to vector<1x16x8xf32>
    %89 = vector.broadcast %88 : vector<1x16x8xf32> to vector<4x16x8xf32>
    %90 = arith.mulf %86, %89 : vector<4x16x8xf32>
    %c112 = arith.constant 112 : index
    %c0_31 = arith.constant 0 : index
    %91 = vector.load %arg3[%c112, %c0_31] : memref<248x32xf32, #tpu.memory_space<vmem>>, vector<16x8xf32>
    %92 = vector.shape_cast %91 : vector<16x8xf32> to vector<1x16x8xf32>
    %93 = vector.broadcast %92 : vector<1x16x8xf32> to vector<4x16x8xf32>
    %94 = arith.addf %90, %93 : vector<4x16x8xf32>
    %95 = vector.shape_cast %94 : vector<4x16x8xf32> to vector<64x8xf32>
    %96 = vector.extract_strided_slice %95 {offsets = [48, 0], sizes = [16, 8], strides = [1, 1]} : vector<64x8xf32> to vector<16x8xf32>
    %cst_32 = arith.constant 0.000000e+00 : f32
    %97 = vector.broadcast %cst_32 : f32 to vector<16x8xf32>
    %98 = tpu.concatenate %96, %97 in 1 : vector<16x8xf32>, vector<16x8xf32> -> vector<16x16xf32>
    %99 = vector.extract_strided_slice %95 {offsets = [0, 0], sizes = [16, 8], strides = [1, 1]} : vector<64x8xf32> to vector<16x8xf32>
    %100 = vector.extract_strided_slice %95 {offsets = [16, 0], sizes = [16, 8], strides = [1, 1]} : vector<64x8xf32> to vector<16x8xf32>
    %101 = vector.extract_strided_slice %95 {offsets = [32, 0], sizes = [16, 8], strides = [1, 1]} : vector<64x8xf32> to vector<16x8xf32>
    %102 = vector.extract_strided_slice %95 {offsets = [48, 0], sizes = [16, 8], strides = [1, 1]} : vector<64x8xf32> to vector<16x8xf32>
    %103 = tpu.concatenate %99, %100, %101, %102 in 1 : vector<16x8xf32>, vector<16x8xf32>, vector<16x8xf32>, vector<16x8xf32> -> vector<16x32xf32>
    %c128 = arith.constant 128 : index
    %c0_33 = arith.constant 0 : index
    %104 = vector.load %arg3[%c128, %c0_33] : memref<248x32xf32, #tpu.memory_space<vmem>>, vector<32x32xf32>
    %cst_34 = arith.constant dense<0.000000e+00> : vector<16x32xf32>
    %105 = tpu.matmul %103, %104, %cst_34 {dimension_numbers = #tpu.dot_dimension_numbers<[1], [0], [0], [1], [0, 0, 1, 1], [], []>} : vector<16x32xf32>, vector<32x32xf32>, vector<16x32xf32> -> vector<16x32xf32>
    %c160 = arith.constant 160 : index
    %c0_35 = arith.constant 0 : index
    %106 = vector.load %arg3[%c160, %c0_35] : memref<248x32xf32, #tpu.memory_space<vmem>>, vector<1x32xf32>
    %107 = vector.broadcast %106 : vector<1x32xf32> to vector<16x32xf32>
    %108 = arith.addf %105, %107 : vector<16x32xf32>
    %109 = vector.extract_strided_slice %108 {offsets = [0, 0], sizes = [16, 16], strides = [1, 1]} : vector<16x32xf32> to vector<16x16xf32>
    %110 = arith.addf %109, %98 : vector<16x16xf32>
    %111 = vector.extract_strided_slice %108 {offsets = [0, 16], sizes = [16, 16], strides = [1, 1]} : vector<16x32xf32> to vector<16x16xf32>
    %112 = arith.negf %111 : vector<16x16xf32>
    %113 = math.exp %112 : vector<16x16xf32>
    %cst_36 = arith.constant 1.000000e+00 : f32
    %114 = vector.broadcast %cst_36 : f32 to vector<16x16xf32>
    %115 = arith.addf %114, %113 : vector<16x16xf32>
    %116 = arith.divf %114, %115 : vector<16x16xf32>
    %117 = arith.mulf %110, %116 : vector<16x16xf32>
    %118 = vector.shape_cast %117 : vector<16x16xf32> to vector<1x16x16xf32>
    %cst_37 = arith.constant dense<0.000000e+00> : vector<1x16xf32>
    %119 = vector.multi_reduction <add>, %118, %cst_37 [2] : vector<1x16x16xf32> to vector<1x16xf32>
    %120 = vector.shape_cast %119 : vector<1x16xf32> to vector<1x16x1xf32>
    %cst_38 = arith.constant dense<0.000000e+00> : vector<1x1xf32>
    %121 = vector.multi_reduction <add>, %120, %cst_38 [1] : vector<1x16x1xf32> to vector<1x1xf32>
    %122 = vector.shape_cast %121 : vector<1x1xf32> to vector<1x1x1xf32>
    %cst_39 = arith.constant 3.906250e-03 : f32
    %123 = vector.broadcast %cst_39 : f32 to vector<1x1x1xf32>
    %124 = arith.mulf %122, %123 : vector<1x1x1xf32>
    %125 = vector.broadcast %124 : vector<1x1x1xf32> to vector<1x16x16xf32>
    %126 = arith.subf %118, %125 : vector<1x16x16xf32>
    %127 = arith.mulf %126, %126 : vector<1x16x16xf32>
    %cst_40 = arith.constant dense<0.000000e+00> : vector<1x16xf32>
    %128 = vector.multi_reduction <add>, %127, %cst_40 [2] : vector<1x16x16xf32> to vector<1x16xf32>
    %129 = vector.shape_cast %128 : vector<1x16xf32> to vector<1x16x1xf32>
    %cst_41 = arith.constant dense<0.000000e+00> : vector<1x1xf32>
    %130 = vector.multi_reduction <add>, %129, %cst_41 [1] : vector<1x16x1xf32> to vector<1x1xf32>
    %131 = vector.shape_cast %130 : vector<1x1xf32> to vector<1x1x1xf32>
    %cst_42 = arith.constant 3.906250e-03 : f32
    %132 = vector.broadcast %cst_42 : f32 to vector<1x1x1xf32>
    %133 = arith.mulf %131, %132 : vector<1x1x1xf32>
    %cst_43 = arith.constant 9.99999974E-6 : f32
    %134 = vector.broadcast %cst_43 : f32 to vector<1x1x1xf32>
    %135 = arith.addf %133, %134 : vector<1x1x1xf32>
    %136 = math.rsqrt %135 : vector<1x1x1xf32>
    %137 = vector.broadcast %136 : vector<1x1x1xf32> to vector<1x16x16xf32>
    %138 = arith.mulf %126, %137 : vector<1x16x16xf32>
    %c168 = arith.constant 168 : index
    %c0_44 = arith.constant 0 : index
    %139 = vector.load %arg3[%c168, %c0_44] : memref<248x32xf32, #tpu.memory_space<vmem>>, vector<16x16xf32>
    %140 = vector.shape_cast %139 : vector<16x16xf32> to vector<1x16x16xf32>
    %141 = arith.mulf %138, %140 : vector<1x16x16xf32>
    %c184 = arith.constant 184 : index
    %c0_45 = arith.constant 0 : index
    %142 = vector.load %arg3[%c184, %c0_45] : memref<248x32xf32, #tpu.memory_space<vmem>>, vector<16x16xf32>
    %143 = vector.shape_cast %142 : vector<16x16xf32> to vector<1x16x16xf32>
    %144 = arith.addf %141, %143 : vector<1x16x16xf32>
    %145 = vector.shape_cast %144 : vector<1x16x16xf32> to vector<16x16xf32>
    %c200 = arith.constant 200 : index
    %c0_46 = arith.constant 0 : index
    %146 = vector.load %arg3[%c200, %c0_46] : memref<248x32xf32, #tpu.memory_space<vmem>>, vector<16x16xf32>
    %cst_47 = arith.constant dense<0.000000e+00> : vector<16x16xf32>
    %147 = tpu.matmul %145, %146, %cst_47 {dimension_numbers = #tpu.dot_dimension_numbers<[1], [0], [0], [1], [0, 0, 1, 1], [], []>} : vector<16x16xf32>, vector<16x16xf32>, vector<16x16xf32> -> vector<16x16xf32>
    %c216 = arith.constant 216 : index
    %c0_48 = arith.constant 0 : index
    %148 = vector.load %arg3[%c216, %c0_48] : memref<248x32xf32, #tpu.memory_space<vmem>>, vector<1x16xf32>
    %149 = vector.broadcast %148 : vector<1x16xf32> to vector<16x16xf32>
    %150 = arith.addf %147, %149 : vector<16x16xf32>
    %cst_49 = arith.constant 0.000000e+00 : f32
    %151 = vector.broadcast %cst_49 : f32 to vector<16x16xf32>
    %152 = arith.maximumf %150, %151 : vector<16x16xf32>
    %c224 = arith.constant 224 : index
    %c0_50 = arith.constant 0 : index
    %153 = vector.load %arg3[%c224, %c0_50] : memref<248x32xf32, #tpu.memory_space<vmem>>, vector<16x1xf32>
    %cst_51 = arith.constant dense<0.000000e+00> : vector<16x1xf32>
    %154 = tpu.matmul %152, %153, %cst_51 {dimension_numbers = #tpu.dot_dimension_numbers<[1], [0], [0], [1], [0, 0, 1, 1], [], []>} : vector<16x16xf32>, vector<16x1xf32>, vector<16x1xf32> -> vector<16x1xf32>
    %c240 = arith.constant 240 : index
    %c0_52 = arith.constant 0 : index
    %155 = vector.load %arg3[%c240, %c0_52] : memref<248x32xf32, #tpu.memory_space<vmem>>, vector<1x1xf32>
    %156 = vector.broadcast %155 : vector<1x1xf32> to vector<16x1xf32>
    %157 = arith.addf %154, %156 : vector<16x1xf32>
    %c0_53 = arith.constant 0 : index
    %c0_54 = arith.constant 0 : index
    %c0_55 = arith.constant 0 : index
    %158 = vector.load %arg4[%c0_53, %c0_54, %c0_55] : memref<1x16x1xf32, #tpu.memory_space<vmem>>, vector<1x16x1xf32>
    %159 = vector.shape_cast %158 : vector<1x16x1xf32> to vector<16x1xf32>
    %160 = vector.shape_cast %157 : vector<16x1xf32> to vector<1x16x1xf32>
    tpu.vector_store %arg4[%c0_53, %c0_54, %c0_55], %160 {strides = array<i32>} : memref<1x16x1xf32, #tpu.memory_space<vmem>>, vector<1x16x1xf32>,
    return
  }
  func.func @transform_0(%arg0: i32) -> (i32, i32, i32) {
    %c0_i32 = arith.constant 0 : i32
    %c0_i32_0 = arith.constant 0 : i32
    %c0_i32_1 = arith.constant 0 : i32
    return %arg0, %c0_i32, %c0_i32_0 : i32, i32, i32
  }
  func.func @transform_1(%arg0: i32) -> (i32, i32) {
    %c0_i32 = arith.constant 0 : i32
    %c0_i32_0 = arith.constant 0 : i32
    %c0_i32_1 = arith.constant 0 : i32
    return %c0_i32, %c0_i32_0 : i32, i32
  }
  func.func @transform_2(%arg0: i32) -> (i32, i32) {
    %c0_i32 = arith.constant 0 : i32
    %c0_i32_0 = arith.constant 0 : i32
    %c0_i32_1 = arith.constant 0 : i32
    return %c0_i32, %c0_i32_0 : i32, i32
  }
  func.func @transform_3(%arg0: i32) -> (i32, i32, i32) {
    %c0_i32 = arith.constant 0 : i32
    %c0_i32_0 = arith.constant 0 : i32
    %c0_i32_1 = arith.constant 0 : i32
    return %arg0, %c0_i32, %c0_i32_0 : i32, i32, i32
  }
}

</mosaic_0001>

<llo_original>
// kernel: stgcn_forward.1
$region0: #{stgcn_forward.1}
  #allocation0 [shape = 'u32[]', space=smem, size = 0x4, offset = 0x4, fixed_abs, tag = 'smem constant byte address 0x4 - core index']
  #allocation1 [shape = 'u32[144,128]{1,0:T(1,128)}', space=vmem, size = 0x12000, scoped, tag = 'internal scratch']
  %s0 = inlined_call_operand.vmem [shape: f32[2,128,8], index: 0, kind: input, shape index: {}]
  %s1 = inlined_call_operand.vmem [shape: f32[16,16], index: 1, kind: input, shape index: {}]
  %s2 = inlined_call_operand.vmem [shape: f32[248,32], index: 2, kind: input, shape index: {}]
  %s3 = inlined_call_operand.vmem [shape: f32[2,16,1], index: 3, kind: output, shape index: {}]
  %s4 = sld [smem:[#allocation0]]
  $region45: #{stgcn_forward.1} parent=0
    _
  %s6 = ssub.s32 1, %s4
  %s7 = scalar_select 0, %s6, %s4
  loop: start=0, step=1, limit=4
  $region2: #{stgcn_forward.1} parent=0 // loop_pre_header
    _
  $region3: #{stgcn_forward.1} parent=0 // loop_header
    %s9 = sphi 0, %s13
    %p10 = scmp.ge.s32.totalorder %s9, 4
    %s19 = sphi 0, %s21
    %s22 = sphi 0, %s19
    %s23 = sphi 0, %s22
    %s39 = sphi 0, %s23
    %s43 = sphi 0, %s43
    %s45 = sphi 0, %s43
    %s46 = sphi 0, %s45
    %s60 = sphi 0, %s46
    %s64 = sphi 0, %s64
    %s66 = sphi 0, %s64
    %s67 = sphi 0, %s66
    %s81 = sphi 0, %s67
    %s87 = sphi 0, %s89
    %s90 = sphi 0, %s87
    %s91 = sphi 0, %s90
    %s107 = sphi 0, %s91
  $region4: #{stgcn_forward.1} parent=0 // loop_header_branch
    %12 = sbr.rel (%p10) target = $region8
  $region5: #{stgcn_forward.1} parent=0 // loop_body
    %s14 = ssub.s32 %s9, 1
    %s15 = ssub.s32 %s9, 2
    %s16 = sadd.s32 %s9, 1
    %s17 = ssub.s32 %s9, %s16
    %p18 = scmp.eq.s32.totalorder %s17, 0
    %s20 = sadd.s32 %s19, 1
    %s21 = scalar_select %p18, %s19, %s20
    %p24 = pneg %p18
    %p25 = scmp.eq.s32.totalorder %s9, 1
    %p26 = por %p24, %p25
    %p27 = scmp.ne.s32.totalorder %s19, %s22
    %p28 = scmp.eq.s32.totalorder %s9, 0
    %p29 = por %p27, %p28
    %p30 = scmp.ne.s32.totalorder %s19, %s22
    %p31 = scmp.eq.s32.totalorder %s14, 1
    %p32 = por %p30, %p31
    %p33 = scmp.ne.s32.totalorder %s22, %s23
    %p34 = scmp.eq.s32.totalorder %s14, 0
    %p35 = por %p33, %p34
    %p36 = scmp.ne.s32.totalorder %s22, %s23
    %p37 = scmp.eq.s32.totalorder %s15, 1
    %p38 = por %p36, %p37
    %p40 = scmp.ne.s32.totalorder %s23, %s39
    %p41 = scmp.eq.s32.totalorder %s15, 0
    %p42 = por %p40, %p41
    %s44 = sadd.s32 %s43, 1
    %p47 = scmp.eq.s32.totalorder %s9, 1
    %p48 = scmp.ne.s32.totalorder %s43, %s45
    %p49 = scmp.eq.s32.totalorder %s9, 0
    %p50 = por %p48, %p49
    %p51 = scmp.ne.s32.totalorder %s43, %s45
    %p52 = scmp.eq.s32.totalorder %s14, 1
    %p53 = por %p51, %p52
    %p54 = scmp.ne.s32.totalorder %s45, %s46
    %p55 = scmp.eq.s32.totalorder %s14, 0
    %p56 = por %p54, %p55
    %p57 = scmp.ne.s32.totalorder %s45, %s46
    %p58 = scmp.eq.s32.totalorder %s15, 1
    %p59 = por %p57, %p58
    %p61 = scmp.ne.s32.totalorder %s46, %s60
    %p62 = scmp.eq.s32.totalorder %s15, 0
    %p63 = por %p61, %p62
    %s65 = sadd.s32 %s64, 1
    %p68 = scmp.eq.s32.totalorder %s9, 1
    %p69 = scmp.ne.s32.totalorder %s64, %s66
    %p70 = scmp.eq.s32.totalorder %s9, 0
    %p71 = por %p69, %p70
    %p72 = scmp.ne.s32.totalorder %s64, %s66
    %p73 = scmp.eq.s32.totalorder %s14, 1
    %p74 = por %p72, %p73
    %p75 = scmp.ne.s32.totalorder %s66, %s67
    %p76 = scmp.eq.s32.totalorder %s14, 0
    %p77 = por %p75, %p76
    %p78 = scmp.ne.s32.totalorder %s66, %s67
    %p79 = scmp.eq.s32.totalorder %s15, 1
    %p80 = por %p78, %p79
    %p82 = scmp.ne.s32.totalorder %s67, %s81
    %p83 = scmp.eq.s32.totalorder %s15, 0
    %p84 = por %p82, %p83
    %s85 = ssub.s32 %s9, %s16
    %p86 = scmp.eq.s32.totalorder %s85, 0
    %s88 = sadd.s32 %s87, 1
    %s89 = scalar_select %p86, %s87, %s88
    %p92 = pneg %p86
    %p93 = scmp.eq.s32.totalorder %s9, 1
    %p94 = por %p92, %p93
    %p95 = scmp.ne.s32.totalorder %s87, %s90
    %p96 = scmp.eq.s32.totalorder %s9, 0
    %p97 = por %p95, %p96
    %p98 = scmp.ne.s32.totalorder %s87, %s90
    %p99 = scmp.eq.s32.totalorder %s14, 1
    %p100 = por %p98, %p99
    %p101 = scmp.ne.s32.totalorder %s90, %s91
    %p102 = scmp.eq.s32.totalorder %s14, 0
    %p103 = por %p101, %p102
    %p104 = scmp.ne.s32.totalorder %s90, %s91
    %p105 = scmp.eq.s32.totalorder %s15, 1
    %p106 = por %p104, %p105
    %p108 = scmp.ne.s32.totalorder %s91, %s107
    %p109 = scmp.eq.s32.totalorder %s15, 0
    %p110 = por %p108, %p109
    %p111 = scmp.le.s32.totalorder 1, %s9
    %p112 = scmp.lt.s32.totalorder %s9, 3
    %p113 = pnand %p111, %p112
    %p114 = pneg %p113
    // Predicated region
    $region9: #{stgcn_forward.1} parent=5 // pred_check
      _
    $region10: #{stgcn_forward.1} parent=5 // pred_check_branch
      %116 = sbr.rel (%p113) target = $region12
    $region11: #{stgcn_forward.1} parent=5 // pred_region
      %s117 = ssub.s32 %s9, 1
      // Predicated region
      $region13: #{stgcn_forward.1} parent=11 // pred_check
        %p118 = pneg %p56
      $region14: #{stgcn_forward.1} parent=11 // pred_check_branch
        %120 = sbr.rel (%p118) target = $region16
      $region15: #{stgcn_forward.1} parent=11 // pred_region
        _
      $region16: #{stgcn_forward.1} parent=11 // pred_fallthru
        _
      // Predicated region
      $region17: #{stgcn_forward.1} parent=11 // pred_check
        %p121 = pneg %p77
      $region18: #{stgcn_forward.1} parent=11 // pred_check_branch
        %123 = sbr.rel (%p121) target = $region20
      $region19: #{stgcn_forward.1} parent=11 // pred_region
        _
      $region20: #{stgcn_forward.1} parent=11 // pred_fallthru
        _
    $region12: #{stgcn_forward.1} parent=5 // pred_fallthru
      _
    %p124 = scmp.lt.s32.totalorder %s9, 2
    // Predicated region
    $region21: #{stgcn_forward.1} parent=5 // pred_check
      %p125 = pneg %p124
    $region22: #{stgcn_forward.1} parent=5 // pred_check_branch
      %127 = sbr.rel (%p125) target = $region24
    $region23: #{stgcn_forward.1} parent=5 // pred_region
      // Predicated region
      $region25: #{stgcn_forward.1} parent=23 // pred_check
        %p128 = pneg %p29
      $region26: #{stgcn_forward.1} parent=23 // pred_check_branch
        %130 = sbr.rel (%p128) target = $region28
      $region27: #{stgcn_forward.1} parent=23 // pred_region
        %p131 = scmp.lt.s32.totalorder %s9, 1
        %s132 = scalar_select %p131, %s9, 1
        %s133 = smul.addr %s132, 16
        %s134 = smul.addr %s133, 8
        %s135 = scalar_lea.vmem %s0, %s134
      $region28: #{stgcn_forward.1} parent=23 // pred_fallthru
        _
    $region24: #{stgcn_forward.1} parent=5 // pred_fallthru
      _
    %p136 = scmp.le.s32.totalorder 1, %s9
    %p137 = scmp.lt.s32.totalorder %s9, 3
    %p138 = pnand %p136, %p137
    %p139 = pneg %p138
    // Predicated region
    $region29: #{stgcn_forward.1} parent=5 // pred_check
      _
    $region30: #{stgcn_forward.1} parent=5 // pred_check_branch
      %141 = sbr.rel (%p138) target = $region32
    $region31: #{stgcn_forward.1} parent=5 // pred_region
      %s142 = ssub.s32 %s9, 1
      %p143 = scmp.lt.s32.totalorder %s14, 1
      %s144 = scalar_select %p143, %s14, 1
      %s145 = smul.addr %s144, 16
      %s146 = smul.addr %s145, 8
      %s147 = scalar_lea.vmem %s0, %s146
      %p148 = pneg %p35
      %p149 = pneg %p32
      %p150 = pneg %p56
      %p151 = pneg %p53
      %p152 = pneg %p77
      %p153 = pneg %p74
      %p154 = pneg %p103
      %p155 = pneg %p100
      %p156 = scmp.lt.s32.totalorder %s14, 1
      %s157 = scalar_select %p156, %s14, 1
      %s158 = smul.addr %s157, 2
      %s159 = smul.addr %s158, 8
      %s160 = scalar_lea.vmem %s3, %s159
      %p161 = scmp.lt.s32.totalorder %s14, 1
      %s162 = scalar_select %p161, %s14, 1
      %s163 = smul.addr %s162, 16
      %s164 = smul.addr %s163, 8
      %s165 = scalar_lea.vmem %s0, %s164
      %p166 = scmp.lt.s32.totalorder %s14, 1
      %s167 = scalar_select %p166, %s14, 1
      %s168 = smul.addr %s167, 2
      %s169 = smul.addr %s168, 8
      %s170 = scalar_lea.vmem %s3, %s169
      %v171 = vld [vmem:[%s165] sm:$0xff]
      %v172 = vld [vmem:[%s165 + $0x8] sm:$0xff]
      %v173 = vld [vmem:[%s165 + $0x10] sm:$0xff]
      %v174 = vld [vmem:[%s165 + $0x18] sm:$0xff]
      %v175 = vld [vmem:[%s165 + $0x20] sm:$0xff]
      %v176 = vld [vmem:[%s165 + $0x28] sm:$0xff]
      %v177 = vld [vmem:[%s165 + $0x30] sm:$0xff]
      %v178 = vld [vmem:[%s165 + $0x38] sm:$0xff]
      %v179 = vld [vmem:[%s165 + $0x40] sm:$0xff]
      %v180 = vld [vmem:[%s165 + $0x48] sm:$0xff]
      %v181 = vld [vmem:[%s165 + $0x50] sm:$0xff]
      %v182 = vld [vmem:[%s165 + $0x58] sm:$0xff]
      %v183 = vld [vmem:[%s165 + $0x60] sm:$0xff]
      %v184 = vld [vmem:[%s165 + $0x68] sm:$0xff]
      %v185 = vld [vmem:[%s165 + $0x70] sm:$0xff]
      %v186 = vld [vmem:[%s165 + $0x78] sm:$0xff]
      %199 = vrot.lane.b32.xlu0 %v173, 8
      %v200 = vpop.permute.xlu0 %199
      %201 = vrot.lane.b32.xlu0 %v174, 8
      %v202 = vpop.permute.xlu0 %201
      %203 = vrot.lane.b32.xlu0 %v175, 8
      %v204 = vpop.permute.xlu0 %203
      %205 = vrot.lane.b32.xlu0 %v176, 8
      %v206 = vpop.permute.xlu0 %205
      %207 = vrot.lane.b32.xlu0 %v177, 8
      %v208 = vpop.permute.xlu0 %207
      %209 = vrot.lane.b32.xlu0 %v178, 8
      %v210 = vpop.permute.xlu0 %209
      %211 = vrot.lane.b32.xlu0 %v179, 8
      %v212 = vpop.permute.xlu0 %211
      %213 = vrot.lane.b32.xlu0 %v180, 8
      %v214 = vpop.permute.xlu0 %213
      %215 = vrot.lane.b32.xlu0 %v181, 8
      %v216 = vpop.permute.xlu0 %215
      %217 = vrot.lane.b32.xlu0 %v182, 8
      %v218 = vpop.permute.xlu0 %217
      %219 = vrot.lane.b32.xlu0 %v183, 8
      %v220 = vpop.permute.xlu0 %219
      %221 = vrot.lane.b32.xlu0 %v184, 8
      %v222 = vpop.permute.xlu0 %221
      %237 = vrot.lane.b32.xlu0 %v175, 16
      %v238 = vpop.permute.xlu0 %237
      %239 = vrot.lane.b32.xlu0 %v176, 16
      %v240 = vpop.permute.xlu0 %239
      %241 = vrot.lane.b32.xlu0 %v177, 16
      %v242 = vpop.permute.xlu0 %241
      %243 = vrot.lane.b32.xlu0 %v178, 16
      %v244 = vpop.permute.xlu0 %243
      %245 = vrot.lane.b32.xlu0 %v179, 16
      %v246 = vpop.permute.xlu0 %245
      %247 = vrot.lane.b32.xlu0 %v180, 16
      %v248 = vpop.permute.xlu0 %247
      %249 = vrot.lane.b32.xlu0 %v181, 16
      %v250 = vpop.permute.xlu0 %249
      %251 = vrot.lane.b32.xlu0 %v182, 16
      %v252 = vpop.permute.xlu0 %251
      %253 = vrot.lane.b32.xlu0 %v183, 16
      %v254 = vpop.permute.xlu0 %253
      %255 = vrot.lane.b32.xlu0 %v184, 16
      %v256 = vpop.permute.xlu0 %255
      %257 = vrot.lane.b32.xlu0 %v185, 16
      %v258 = vpop.permute.xlu0 %257
      %259 = vrot.lane.b32.xlu0 %v186, 16
      %v260 = vpop.permute.xlu0 %259
      %vm273 = vcmask 64512
      %v274 = vsel %vm273, %v171, %v200
      %v275 = vsel %vm273, %v172, %v202
      %v276 = vsel %vm273, %v173, %v204
      %v277 = vsel %vm273, %v174, %v206
      %v278 = vsel %vm273, %v175, %v208
      %v279 = vsel %vm273, %v176, %v210
      %v280 = vsel %vm273, %v177, %v212
      %v281 = vsel %vm273, %v178, %v214
      %v282 = vsel %vm273, %v179, %v216
      %v283 = vsel %vm273, %v180, %v218
      %v284 = vsel %vm273, %v181, %v220
      %v285 = vsel %vm273, %v182, %v222
      %vm286 = vcmask 130048
      %v287 = vsel %vm286, %v274, %v238
      %v288 = vsel %vm286, %v275, %v240
      %v289 = vsel %vm286, %v276, %v242
      %v290 = vsel %vm286, %v277, %v244
      %v291 = vsel %vm286, %v278, %v246
      %v292 = vsel %vm286, %v279, %v248
      %v293 = vsel %vm286, %v280, %v250
      %v294 = vsel %vm286, %v281, %v252
      %v295 = vsel %vm286, %v282, %v254
      %v296 = vsel %vm286, %v283, %v256
      %v297 = vsel %vm286, %v284, %v258
      %v298 = vsel %vm286, %v285, %v260
      %v299 = vld [vmem:[%s2] sm:$0xff]
      %v300 = vld [vmem:[%s2 + $0x8] sm:$0xff]
      %v301 = vld [vmem:[%s2 + $0x10] sm:$0xff]
      %v302 = vld [vmem:[%s2 + $0x18] sm:$0x1]
      %v303 = vlaneseq
      %v304 = vshrl.u32 %v303, 7
      %v305 = vsub.s32 0, %v304
      %v306 = vrot.slane %v302, %v305
      %vm307 = vcmask 195584
      %v309 = vsel %vm307, %v287, 0
      %v312 = vsel %vm307, %v288, 0
      %v315 = vsel %vm307, %v289, 0
      %v318 = vsel %vm307, %v290, 0
      %v321 = vsel %vm307, %v291, 0
      %v324 = vsel %vm307, %v292, 0
      %v327 = vsel %vm307, %v293, 0
      %v330 = vsel %vm307, %v294, 0
      %v333 = vsel %vm307, %v295, 0
      %v336 = vsel %vm307, %v296, 0
      %v339 = vsel %vm307, %v297, 0
      %v342 = vsel %vm307, %v298, 0
      %344 = vmatprep.subr.mxu0 0.0
      %345 = vmatpush1.msra.mxu0 %v299
      %346 = vmatprep.subr.mxu0 0.0
      %347 = vmatpush1.msra.mxu0 %v300
      %348 = vmatprep.subr.mxu0 0.0
      %349 = vmatpush1.msra.mxu0 %v301
      %350 = vmatprep.subr.mxu0 0.0
      %351 = vmatpush1.msra.mxu0 0.0
      %352 = vmatprep.subr.mxu0 0.0
      %353 = vmatpush1.msra.mxu0 0.0
      %354 = vmatprep.subr.mxu0 0.0
      %355 = vmatpush1.msra.mxu0 0.0
      %356 = vmatprep.subr.mxu0 0.0
      %357 = vmatpush1.msra.mxu0 0.0
      %358 = vmatprep.subr.mxu0 0.0
      %359 = vmatpush1.msra.mxu0 0.0
      %360 = vmatprep.subr.mxu0 0.0
      %361 = vmatpush1.msra.mxu0 0.0
      %362 = vmatprep.subr.mxu0 0.0
      %363 = vmatpush1.msra.mxu0 0.0
      %364 = vmatprep.subr.mxu0 0.0
      %365 = vmatpush1.msra.mxu0 0.0
      %366 = vmatprep.subr.mxu0 0.0
      %367 = vmatpush1.msra.mxu0 0.0
      %368 = vmatprep.subr.mxu0 0.0
      %369 = vmatpush1.msra.mxu0 0.0
      %370 = vmatprep.subr.mxu0 0.0
      %371 = vmatpush1.msra.mxu0 0.0
      %372 = vmatprep.subr.mxu0 0.0
      %373 = vmatpush1.msra.mxu0 0.0
      %374 = vmatprep.subr.mxu0 0.0
      %375 = vmatpush1.msra.mxu0 0.0
      %376 = vmatprep.subr.mxu0 0.0
      %377 = vmatpush1.msra.mxu0 0.0
      %378 = vmatprep.subr.mxu0 0.0
      %379 = vmatpush1.msra.mxu0 0.0
      %380 = vmatprep.subr.mxu0 0.0
      %381 = vmatpush1.msra.mxu0 0.0
      %382 = vmatprep.subr.mxu0 0.0
      %383 = vmatpush1.msra.mxu0 0.0
      %384 = vmatprep.subr.mxu0 0.0
      %385 = vmatpush1.msra.mxu0 0.0
      %386 = vmatprep.subr.mxu0 0.0
      %387 = vmatpush1.msra.mxu0 0.0
      %388 = vmatprep.subr.mxu0 0.0
      %389 = vmatpush1.msra.mxu0 0.0
      %390 = vmatprep.subr.mxu0 0.0
      %391 = vmatpush1.msra.mxu0 0.0
      %392 = vmatprep.subr.mxu0 0.0
      %393 = vmatpush1.msra.mxu0 0.0
      %394 = vmatprep.subr.mxu0 0.0
      %395 = vmatpush1.msra.mxu0 0.0
      %396 = vmatprep.subr.mxu0 0.0
      %397 = vmatpush1.msra.mxu0 0.0
      %398 = vmatprep.subr.mxu0 0.0
      %399 = vmatpush1.msra.mxu0 0.0
      %400 = vmatprep.subr.mxu0 0.0
      %401 = vmatpush1.msra.mxu0 0.0
      %402 = vmatprep.subr.mxu0 0.0
      %403 = vmatpush1.msra.mxu0 0.0
      %404 = vmatprep.subr.mxu0 0.0
      %405 = vmatpush1.msra.mxu0 0.0
      %406 = vmatprep.subr.mxu0 0.0
      %407 = vmatpush1.msra.mxu0 0.0
      %408 = vmatprep.mubr.f32.mxu0 0.0
      %409 = vmatmul.mubr.f32.gmra.mrb[0].mxu0 %v309
      %v410 = vpop.f32.mrb[0].mxu0
      %v411 = vadd.f32 %v306, %v410
      %v412 = vpop.f32.mrb[0].mxu0
      %413 = vmatprep.mubr.f32.mxu0 0.0
      %414 = vmatmul.mubr.f32.gmra.mrb[0].mxu0 %v312
      %v415 = vpop.f32.mrb[0].mxu0
      %v416 = vadd.f32 %v306, %v415
      %v417 = vpop.f32.mrb[0].mxu0
      %418 = vmatprep.mubr.f32.mxu0 0.0
      %419 = vmatmul.mubr.f32.gmra.mrb[0].mxu0 %v315
      %v420 = vpop.f32.mrb[0].mxu0
      %v421 = vadd.f32 %v306, %v420
      %v422 = vpop.f32.mrb[0].mxu0
      %423 = vmatprep.mubr.f32.mxu0 0.0
      %424 = vmatmul.mubr.f32.gmra.mrb[0].mxu0 %v318
      %v425 = vpop.f32.mrb[0].mxu0
      %v426 = vadd.f32 %v306, %v425
      %v427 = vpop.f32.mrb[0].mxu0
      %428 = vmatprep.mubr.f32.mxu0 0.0
      %429 = vmatmul.mubr.f32.gmra.mrb[0].mxu0 %v321
      %v430 = vpop.f32.mrb[0].mxu0
      %v431 = vadd.f32 %v306, %v430
      %v432 = vpop.f32.mrb[0].mxu0
      %433 = vmatprep.mubr.f32.mxu0 0.0
      %434 = vmatmul.mubr.f32.gmra.mrb[0].mxu0 %v324
      %v435 = vpop.f32.mrb[0].mxu0
      %v436 = vadd.f32 %v306, %v435
      %v437 = vpop.f32.mrb[0].mxu0
      %438 = vmatprep.mubr.f32.mxu0 0.0
      %439 = vmatmul.mubr.f32.gmra.mrb[0].mxu0 %v327
      %v440 = vpop.f32.mrb[0].mxu0
      %v441 = vadd.f32 %v306, %v440
      %v442 = vpop.f32.mrb[0].mxu0
      %443 = vmatprep.mubr.f32.mxu0 0.0
      %444 = vmatmul.mubr.f32.gmra.mrb[0].mxu0 %v330
      %v445 = vpop.f32.mrb[0].mxu0
      %v446 = vadd.f32 %v306, %v445
      %v447 = vpop.f32.mrb[0].mxu0
      %448 = vmatprep.mubr.f32.mxu0 0.0
      %449 = vmatmul.mubr.f32.gmra.mrb[0].mxu0 %v333
      %v450 = vpop.f32.mrb[0].mxu0
      %v451 = vadd.f32 %v306, %v450
      %v452 = vpop.f32.mrb[0].mxu0
      %453 = vmatprep.mubr.f32.mxu0 0.0
      %454 = vmatmul.mubr.f32.gmra.mrb[0].mxu0 %v336
      %v455 = vpop.f32.mrb[0].mxu0
      %v456 = vadd.f32 %v306, %v455
      %v457 = vpop.f32.mrb[0].mxu0
      %458 = vmatprep.mubr.f32.mxu0 0.0
      %459 = vmatmul.mubr.f32.gmra.mrb[0].mxu0 %v339
      %v460 = vpop.f32.mrb[0].mxu0
      %v461 = vadd.f32 %v306, %v460
      %v462 = vpop.f32.mrb[0].mxu0
      %463 = vmatprep.mubr.f32.mxu0 0.0
      %464 = vmatmul.mubr.f32.gmra.mrb[0].mxu0 %v342
      %v465 = vpop.f32.mrb[0].mxu0
      %v466 = vadd.f32 %v306, %v465
      %v467 = vpop.f32.mrb[0].mxu0
      %468 = vdwg.mxu0
      %v469 = vadd.f32 %v411, %v175
      %v470 = vadd.f32 %v416, %v176
      %v471 = vadd.f32 %v421, %v177
      %v472 = vadd.f32 %v426, %v178
      %v473 = vadd.f32 %v431, %v179
      %v474 = vadd.f32 %v436, %v180
      %v475 = vadd.f32 %v441, %v181
      %v476 = vadd.f32 %v446, %v182
      %v477 = vadd.f32 %v451, %v183
      %v478 = vadd.f32 %v456, %v184
      %v479 = vadd.f32 %v461, %v185
      %v480 = vadd.f32 %v466, %v186
      %v481 = vxor.u32 %v411, 2147483648
      %v482 = vxor.u32 %v416, 2147483648
      %v483 = vxor.u32 %v421, 2147483648
      %v484 = vxor.u32 %v426, 2147483648
      %v485 = vxor.u32 %v431, 2147483648
      %v486 = vxor.u32 %v436, 2147483648
      %v487 = vxor.u32 %v441, 2147483648
      %v488 = vxor.u32 %v446, 2147483648
      %v489 = vxor.u32 %v451, 2147483648
      %v490 = vxor.u32 %v456, 2147483648
      %v491 = vxor.u32 %v461, 2147483648
      %v492 = vxor.u32 %v466, 2147483648
      %v493 = vmul.f32 %v481, 1.442695
      %v494 = vpow.pop %v493
      %v495 = vmul.f32 %v482, 1.442695
      %v496 = vpow.pop %v495
      %v497 = vmul.f32 %v483, 1.442695
      %v498 = vpow.pop %v497
      %v499 = vmul.f32 %v484, 1.442695
      %v500 = vpow.pop %v499
      %v501 = vmul.f32 %v485, 1.442695
      %v502 = vpow.pop %v501
      %v503 = vmul.f32 %v486, 1.442695
      %v504 = vpow.pop %v503
      %v505 = vmul.f32 %v487, 1.442695
      %v506 = vpow.pop %v505
      %v507 = vmul.f32 %v488, 1.442695
      %v508 = vpow.pop %v507
      %v509 = vmul.f32 %v489, 1.442695
      %v510 = vpow.pop %v509
      %v511 = vmul.f32 %v490, 1.442695
      %v512 = vpow.pop %v511
      %v513 = vmul.f32 %v491, 1.442695
      %v514 = vpow.pop %v513
      %v515 = vmul.f32 %v492, 1.442695
      %v516 = vpow.pop %v515
      %v517 = vadd.f32 %v494, 1.0
      %v518 = vadd.f32 %v496, 1.0
      %v519 = vadd.f32 %v498, 1.0
      %v520 = vadd.f32 %v500, 1.0
      %v521 = vadd.f32 %v502, 1.0
      %v522 = vadd.f32 %v504, 1.0
      %v523 = vadd.f32 %v506, 1.0
      %v524 = vadd.f32 %v508, 1.0
      %v525 = vadd.f32 %v510, 1.0
      %v526 = vadd.f32 %v512, 1.0
      %v527 = vadd.f32 %v514, 1.0
      %v528 = vadd.f32 %v516, 1.0
      %v529 = vrcp.pop %v517
      %v530 = vmul.f32 1.0, %v529
      %v531 = vrcp.pop %v518
      %v532 = vmul.f32 1.0, %v531
      %v533 = vrcp.pop %v519
      %v534 = vmul.f32 1.0, %v533
      %v535 = vrcp.pop %v520
      %v536 = vmul.f32 1.0, %v535
      %v537 = vrcp.pop %v521
      %v538 = vmul.f32 1.0, %v537
      %v539 = vrcp.pop %v522
      %v540 = vmul.f32 1.0, %v539
      %v541 = vrcp.pop %v523
      %v542 = vmul.f32 1.0, %v541
      %v543 = vrcp.pop %v524
      %v544 = vmul.f32 1.0, %v543
      %v545 = vrcp.pop %v525
      %v546 = vmul.f32 1.0, %v545
      %v547 = vrcp.pop %v526
      %v548 = vmul.f32 1.0, %v547
      %v549 = vrcp.pop %v527
      %v550 = vmul.f32 1.0, %v549
      %v551 = vrcp.pop %v528
      %v552 = vmul.f32 1.0, %v551
      %565 = vrot.lane.b32.xlu0 %v530, 120
      %v566 = vpop.permute.xlu0 %565
      %567 = vrot.lane.b32.xlu0 %v532, 120
      %v568 = vpop.permute.xlu0 %567
      %569 = vrot.lane.b32.xlu0 %v534, 120
      %v570 = vpop.permute.xlu0 %569
      %571 = vrot.lane.b32.xlu0 %v536, 120
      %v572 = vpop.permute.xlu0 %571
      %573 = vrot.lane.b32.xlu0 %v538, 120
      %v574 = vpop.permute.xlu0 %573
      %575 = vrot.lane.b32.xlu0 %v540, 120
      %v576 = vpop.permute.xlu0 %575
      %577 = vrot.lane.b32.xlu0 %v542, 120
      %v578 = vpop.permute.xlu0 %577
      %579 = vrot.lane.b32.xlu0 %v544, 120
      %v580 = vpop.permute.xlu0 %579
      %581 = vrot.lane.b32.xlu0 %v546, 120
      %v582 = vpop.permute.xlu0 %581
      %583 = vrot.lane.b32.xlu0 %v548, 120
      %v584 = vpop.permute.xlu0 %583
      %585 = vrot.lane.b32.xlu0 %v550, 120
      %v586 = vpop.permute.xlu0 %585
      %587 = vrot.lane.b32.xlu0 %v552, 120
      %v588 = vpop.permute.xlu0 %587
      %v601 = vmul.f32 %v469, %v566
      %v602 = vmul.f32 %v470, %v568
      %v603 = vmul.f32 %v471, %v570
      %v604 = vmul.f32 %v472, %v572
      %v605 = vmul.f32 %v473, %v574
      %v606 = vmul.f32 %v474, %v576
      %v607 = vmul.f32 %v475, %v578
      %v608 = vmul.f32 %v476, %v580
      %v609 = vmul.f32 %v477, %v582
      %v610 = vmul.f32 %v478, %v584
      %v611 = vmul.f32 %v479, %v586
      %v612 = vmul.f32 %v480, %v588
      %v613 = vld [vmem:[%s2 + $0x20] sm:$0xff]
      %v614 = vld [vmem:[%s2 + $0x28] sm:$0x1]
      %v615 = vlaneseq
      %v616 = vshrl.u32 %v615, 7
      %v617 = vsub.s32 0, %v616
      %v618 = vrot.slane %v614, %v617
      %v620 = vsel %vm273, %v601, 0
      %v623 = vsel %vm273, %v602, 0
      %v626 = vsel %vm273, %v603, 0
      %v629 = vsel %vm273, %v604, 0
      %v632 = vsel %vm273, %v605, 0
      %v635 = vsel %vm273, %v606, 0
      %v638 = vsel %vm273, %v607, 0
      %v641 = vsel %vm273, %v608, 0
      %v644 = vsel %vm273, %v609, 0
      %v647 = vsel %vm273, %v610, 0
      %v650 = vsel %vm273, %v611, 0
      %v653 = vsel %vm273, %v612, 0
      %655 = vmatprep.subr.mxu0 0.0
      %656 = vmatpush1.msra.mxu0 %v613
      %657 = vmatprep.subr.mxu0 0.0
      %658 = vmatpush1.msra.mxu0 0.0
      %659 = vmatprep.subr.mxu0 0.0
      %660 = vmatpush1.msra.mxu0 0.0
      %661 = vmatprep.subr.mxu0 0.0
      %662 = vmatpush1.msra.mxu0 0.0
      %663 = vmatprep.subr.mxu0 0.0
      %664 = vmatpush1.msra.mxu0 0.0
      %665 = vmatprep.subr.mxu0 0.0
      %666 = vmatpush1.msra.mxu0 0.0
      %667 = vmatprep.subr.mxu0 0.0
      %668 = vmatpush1.msra.mxu0 0.0
      %669 = vmatprep.subr.mxu0 0.0
      %670 = vmatpush1.msra.mxu0 0.0
      %671 = vmatprep.subr.mxu0 0.0
      %672 = vmatpush1.msra.mxu0 0.0
      %673 = vmatprep.subr.mxu0 0.0
      %674 = vmatpush1.msra.mxu0 0.0
      %675 = vmatprep.subr.mxu0 0.0
      %676 = vmatpush1.msra.mxu0 0.0
      %677 = vmatprep.subr.mxu0 0.0
      %678 = vmatpush1.msra.mxu0 0.0
      %679 = vmatprep.subr.mxu0 0.0
      %680 = vmatpush1.msra.mxu0 0.0
      %681 = vmatprep.subr.mxu0 0.0
      %682 = vmatpush1.msra.mxu0 0.0
      %683 = vmatprep.subr.mxu0 0.0
      %684 = vmatpush1.msra.mxu0 0.0
      %685 = vmatprep.subr.mxu0 0.0
      %686 = vmatpush1.msra.mxu0 0.0
      %687 = vmatprep.subr.mxu0 0.0
      %688 = vmatpush1.msra.mxu0 0.0
      %689 = vmatprep.subr.mxu0 0.0
      %690 = vmatpush1.msra.mxu0 0.0
      %691 = vmatprep.subr.mxu0 0.0
      %692 = vmatpush1.msra.mxu0 0.0
      %693 = vmatprep.subr.mxu0 0.0
      %694 = vmatpush1.msra.mxu0 0.0
      %695 = vmatprep.subr.mxu0 0.0
      %696 = vmatpush1.msra.mxu0 0.0
      %697 = vmatprep.subr.mxu0 0.0
      %698 = vmatpush1.msra.mxu0 0.0
      %699 = vmatprep.subr.mxu0 0.0
      %700 = vmatpush1.msra.mxu0 0.0
      %701 = vmatprep.subr.mxu0 0.0
      %702 = vmatpush1.msra.mxu0 0.0
      %703 = vmatprep.subr.mxu0 0.0
      %704 = vmatpush1.msra.mxu0 0.0
      %705 = vmatprep.subr.mxu0 0.0
      %706 = vmatpush1.msra.mxu0 0.0
      %707 = vmatprep.subr.mxu0 0.0
      %708 = vmatpush1.msra.mxu0 0.0
      %709 = vmatprep.subr.mxu0 0.0
      %710 = vmatpush1.msra.mxu0 0.0
      %711 = vmatprep.subr.mxu0 0.0
      %712 = vmatpush1.msra.mxu0 0.0
      %713 = vmatprep.subr.mxu0 0.0
      %714 = vmatpush1.msra.mxu0 0.0
      %715 = vmatprep.subr.mxu0 0.0
      %716 = vmatpush1.msra.mxu0 0.0
      %717 = vmatprep.subr.mxu0 0.0
      %718 = vmatpush1.msra.mxu0 0.0
      %719 = vmatprep.mubr.f32.mxu0 0.0
      %720 = vmatmul.mubr.f32.gmra.mrb[0].mxu0 %v620
      %v721 = vpop.f32.mrb[0].mxu0
      %v722 = vadd.f32 %v618, %v721
      %v723 = vpop.f32.mrb[0].mxu0
      %724 = vmatprep.mubr.f32.mxu0 0.0
      %725 = vmatmul.mubr.f32.gmra.mrb[0].mxu0 %v623
      %v726 = vpop.f32.mrb[0].mxu0
      %v727 = vadd.f32 %v618, %v726
      %v728 = vpop.f32.mrb[0].mxu0
      %729 = vmatprep.mubr.f32.mxu0 0.0
      %730 = vmatmul.mubr.f32.gmra.mrb[0].mxu0 %v626
      %v731 = vpop.f32.mrb[0].mxu0
      %v732 = vadd.f32 %v618, %v731
      %v733 = vpop.f32.mrb[0].mxu0
      %734 = vmatprep.mubr.f32.mxu0 0.0
      %735 = vmatmul.mubr.f32.gmra.mrb[0].mxu0 %v629
      %v736 = vpop.f32.mrb[0].mxu0
      %v737 = vadd.f32 %v618, %v736
      %v738 = vpop.f32.mrb[0].mxu0
      %739 = vmatprep.mubr.f32.mxu0 0.0
      %740 = vmatmul.mubr.f32.gmra.mrb[0].mxu0 %v632
      %v741 = vpop.f32.mrb[0].mxu0
      %v742 = vadd.f32 %v618, %v741
      %v743 = vpop.f32.mrb[0].mxu0
      %744 = vmatprep.mubr.f32.mxu0 0.0
      %745 = vmatmul.mubr.f32.gmra.mrb[0].mxu0 %v635
      %v746 = vpop.f32.mrb[0].mxu0
      %v747 = vadd.f32 %v618, %v746
      %v748 = vpop.f32.mrb[0].mxu0
      %749 = vmatprep.mubr.f32.mxu0 0.0
      %750 = vmatmul.mubr.f32.gmra.mrb[0].mxu0 %v638
      %v751 = vpop.f32.mrb[0].mxu0
      %v752 = vadd.f32 %v618, %v751
      %v753 = vpop.f32.mrb[0].mxu0
      %754 = vmatprep.mubr.f32.mxu0 0.0
      %755 = vmatmul.mubr.f32.gmra.mrb[0].mxu0 %v641
      %v756 = vpop.f32.mrb[0].mxu0
      %v757 = vadd.f32 %v618, %v756
      %v758 = vpop.f32.mrb[0].mxu0
      %759 = vmatprep.mubr.f32.mxu0 0.0
      %760 = vmatmul.mubr.f32.gmra.mrb[0].mxu0 %v644
      %v761 = vpop.f32.mrb[0].mxu0
      %v762 = vadd.f32 %v618, %v761
      %v763 = vpop.f32.mrb[0].mxu0
      %764 = vmatprep.mubr.f32.mxu0 0.0
      %765 = vmatmul.mubr.f32.gmra.mrb[0].mxu0 %v647
      %v766 = vpop.f32.mrb[0].mxu0
      %v767 = vadd.f32 %v618, %v766
      %v768 = vpop.f32.mrb[0].mxu0
      %769 = vmatprep.mubr.f32.mxu0 0.0
      %770 = vmatmul.mubr.f32.gmra.mrb[0].mxu0 %v650
      %v771 = vpop.f32.mrb[0].mxu0
      %v772 = vadd.f32 %v618, %v771
      %v773 = vpop.f32.mrb[0].mxu0
      %774 = vmatprep.mubr.f32.mxu0 0.0
      %775 = vmatmul.mubr.f32.gmra.mrb[0].mxu0 %v653
      %v776 = vpop.f32.mrb[0].mxu0
      %v777 = vadd.f32 %v618, %v776
      %v778 = vpop.f32.mrb[0].mxu0
      %779 = vdwg.mxu0
      %v780 = vld [vmem:[%s1] sm:$0xff]
      %v781 = vld [vmem:[%s1 + $0x8] sm:$0xff]
      %v783 = vsel %vm286, %v780, 0
      %v786 = vsel %vm286, %v781, 0
      %788 = vmatprep.subr.mxu0 0.0
      %789 = vmatpush1.msra.mxu0 %v722
      %790 = vmatprep.subr.mxu0 0.0
      %791 = vmatpush1.msra.mxu0 %v727
      %792 = vmatprep.subr.mxu0 0.0
      %793 = vmatpush1.msra.mxu0 0.0
      %794 = vmatprep.subr.mxu0 0.0
      %795 = vmatpush1.msra.mxu0 0.0
      %796 = vmatprep.subr.mxu0 0.0
      %797 = vmatpush1.msra.mxu0 0.0
      %798 = vmatprep.subr.mxu0 0.0
      %799 = vmatpush1.msra.mxu0 0.0
      %800 = vmatprep.subr.mxu0 0.0
      %801 = vmatpush1.msra.mxu0 0.0
      %802 = vmatprep.subr.mxu0 0.0
      %803 = vmatpush1.msra.mxu0 0.0
      %804 = vmatprep.subr.mxu0 0.0
      %805 = vmatpush1.msra.mxu0 0.0
      %806 = vmatprep.subr.mxu0 0.0
      %807 = vmatpush1.msra.mxu0 0.0
      %808 = vmatprep.subr.mxu0 0.0
      %809 = vmatpush1.msra.mxu0 0.0
      %810 = vmatprep.subr.mxu0 0.0
      %811 = vmatpush1.msra.mxu0 0.0
      %812 = vmatprep.subr.mxu0 0.0
      %813 = vmatpush1.msra.mxu0 0.0
      %814 = vmatprep.subr.mxu0 0.0
      %815 = vmatpush1.msra.mxu0 0.0
      %816 = vmatprep.subr.mxu0 0.0
      %817 = vmatpush1.msra.mxu0 0.0
      %818 = vmatprep.subr.mxu0 0.0
      %819 = vmatpush1.msra.mxu0 0.0
      %820 = vmatprep.subr.mxu0 0.0
      %821 = vmatpush1.msra.mxu0 0.0
      %822 = vmatprep.subr.mxu0 0.0
      %823 = vmatpush1.msra.mxu0 0.0
      %824 = vmatprep.subr.mxu0 0.0
      %825 = vmatpush1.msra.mxu0 0.0
      %826 = vmatprep.subr.mxu0 0.0
      %827 = vmatpush1.msra.mxu0 0.0
      %828 = vmatprep.subr.mxu0 0.0
      %829 = vmatpush1.msra.mxu0 0.0
      %830 = vmatprep.subr.mxu0 0.0
      %831 = vmatpush1.msra.mxu0 0.0
      %832 = vmatprep.subr.mxu0 0.0
      %833 = vmatpush1.msra.mxu0 0.0
      %834 = vmatprep.subr.mxu0 0.0
      %835 = vmatpush1.msra.mxu0 0.0
      %836 = vmatprep.subr.mxu0 0.0
      %837 = vmatpush1.msra.mxu0 0.0
      %838 = vmatprep.subr.mxu0 0.0
      %839 = vmatpush1.msra.mxu0 0.0
      %840 = vmatprep.subr.mxu0 0.0
      %841 = vmatpush1.msra.mxu0 0.0
      %842 = vmatprep.subr.mxu0 0.0
      %843 = vmatpush1.msra.mxu0 0.0
      %844 = vmatprep.subr.mxu0 0.0
      %845 = vmatpush1.msra.mxu0 0.0
      %846 = vmatprep.subr.mxu0 0.0
      %847 = vmatpush1.msra.mxu0 0.0
      %848 = vmatprep.subr.mxu0 0.0
      %849 = vmatpush1.msra.mxu0 0.0
      %850 = vmatprep.subr.mxu0 0.0
      %851 = vmatpush1.msra.mxu0 0.0
      %852 = vmatprep.mubr.f32.mxu0 0.0
      %853 = vmatmul.mubr.f32.gmra.mrb[0].mxu0 %v783
      %v854 = vpop.f32.mrb[0].mxu0
      %v855 = vadd.f32 0.0, %v854
      %v856 = vpop.f32.mrb[0].mxu0
      %857 = vmatprep.mubr.f32.mxu0 0.0
      %858 = vmatmul.mubr.f32.gmra.mrb[0].mxu0 %v786
      %v859 = vpop.f32.mrb[0].mxu0
      %v860 = vadd.f32 0.0, %v859
      %v861 = vpop.f32.mrb[0].mxu0
      %862 = vdwg.mxu0
      %863 = vmatprep.subr.mxu0 0.0
      %864 = vmatpush1.msra.mxu0 %v732
      %865 = vmatprep.subr.mxu0 0.0
      %866 = vmatpush1.msra.mxu0 %v737
      %867 = vmatprep.subr.mxu0 0.0
      %868 = vmatpush1.msra.mxu0 0.0
      %869 = vmatprep.subr.mxu0 0.0
      %870 = vmatpush1.msra.mxu0 0.0
      %871 = vmatprep.subr.mxu0 0.0
      %872 = vmatpush1.msra.mxu0 0.0
      %873 = vmatprep.subr.mxu0 0.0
      %874 = vmatpush1.msra.mxu0 0.0
      %875 = vmatprep.subr.mxu0 0.0
      %876 = vmatpush1.msra.mxu0 0.0
      %877 = vmatprep.subr.mxu0 0.0
      %878 = vmatpush1.msra.mxu0 0.0
      %879 = vmatprep.subr.mxu0 0.0
      %880 = vmatpush1.msra.mxu0 0.0
      %881 = vmatprep.subr.mxu0 0.0
      %882 = vmatpush1.msra.mxu0 0.0
      %883 = vmatprep.subr.mxu0 0.0
      %884 = vmatpush1.msra.mxu0 0.0
      %885 = vmatprep.subr.mxu0 0.0
      %886 = vmatpush1.msra.mxu0 0.0
      %887 = vmatprep.subr.mxu0 0.0
      %888 = vmatpush1.msra.mxu0 0.0
      %889 = vmatprep.subr.mxu0 0.0
      %890 = vmatpush1.msra.mxu0 0.0
      %891 = vmatprep.subr.mxu0 0.0
      %892 = vmatpush1.msra.mxu0 0.0
      %893 = vmatprep.subr.mxu0 0.0
      %894 = vmatpush1.msra.mxu0 0.0
      %895 = vmatprep.subr.mxu0 0.0
      %896 = vmatpush1.msra.mxu0 0.0
      %897 = vmatprep.subr.mxu0 0.0
      %898 = vmatpush1.msra.mxu0 0.0
      %899 = vmatprep.subr.mxu0 0.0
      %900 = vmatpush1.msra.mxu0 0.0
      %901 = vmatprep.subr.mxu0 0.0
      %902 = vmatpush1.msra.mxu0 0.0
      %903 = vmatprep.subr.mxu0 0.0
      %904 = vmatpush1.msra.mxu0 0.0
      %905 = vmatprep.subr.mxu0 0.0
      %906 = vmatpush1.msra.mxu0 0.0
      %907 = vmatprep.subr.mxu0 0.0
      %908 = vmatpush1.msra.mxu0 0.0
      %909 = vmatprep.subr.mxu0 0.0
      %910 = vmatpush1.msra.mxu0 0.0
      %911 = vmatprep.subr.mxu0 0.0
      %912 = vmatpush1.msra.mxu0 0.0
      %913 = vmatprep.subr.mxu0 0.0
      %914 = vmatpush1.msra.mxu0 0.0
      %915 = vmatprep.subr.mxu0 0.0
      %916 = vmatpush1.msra.mxu0 0.0
      %917 = vmatprep.subr.mxu0 0.0
      %918 = vmatpush1.msra.mxu0 0.0
      %919 = vmatprep.subr.mxu0 0.0
      %920 = vmatpush1.msra.mxu0 0.0
      %921 = vmatprep.subr.mxu0 0.0
      %922 = vmatpush1.msra.mxu0 0.0
      %923 = vmatprep.subr.mxu0 0.0
      %924 = vmatpush1.msra.mxu0 0.0
      %925 = vmatprep.subr.mxu0 0.0
      %926 = vmatpush1.msra.mxu0 0.0
      %927 = vmatprep.mubr.f32.mxu0 0.0
      %928 = vmatmul.mubr.f32.gmra.mrb[0].mxu0 %v783
      %v929 = vpop.f32.mrb[0].mxu0
      %v930 = vadd.f32 0.0, %v929
      %v931 = vpop.f32.mrb[0].mxu0
      %932 = vmatprep.mubr.f32.mxu0 0.0
      %933 = vmatmul.mubr.f32.gmra.mrb[0].mxu0 %v786
      %v934 = vpop.f32.mrb[0].mxu0
      %v935 = vadd.f32 0.0, %v934
      %v936 = vpop.f32.mrb[0].mxu0
      %937 = vdwg.mxu0
      %938 = vmatprep.subr.mxu0 0.0
      %939 = vmatpush1.msra.mxu0 %v742
      %940 = vmatprep.subr.mxu0 0.0
      %941 = vmatpush1.msra.mxu0 %v747
      %942 = vmatprep.subr.mxu0 0.0
      %943 = vmatpush1.msra.mxu0 0.0
      %944 = vmatprep.subr.mxu0 0.0
      %945 = vmatpush1.msra.mxu0 0.0
      %946 = vmatprep.subr.mxu0 0.0
      %947 = vmatpush1.msra.mxu0 0.0
      %948 = vmatprep.subr.mxu0 0.0
      %949 = vmatpush1.msra.mxu0 0.0
      %950 = vmatprep.subr.mxu0 0.0
      %951 = vmatpush1.msra.mxu0 0.0
      %952 = vmatprep.subr.mxu0 0.0
      %953 = vmatpush1.msra.mxu0 0.0
      %954 = vmatprep.subr.mxu0 0.0
      %955 = vmatpush1.msra.mxu0 0.0
      %956 = vmatprep.subr.mxu0 0.0
      %957 = vmatpush1.msra.mxu0 0.0
      %958 = vmatprep.subr.mxu0 0.0
      %959 = vmatpush1.msra.mxu0 0.0
      %960 = vmatprep.subr.mxu0 0.0
      %961 = vmatpush1.msra.mxu0 0.0
      %962 = vmatprep.subr.mxu0 0.0
      %963 = vmatpush1.msra.mxu0 0.0
      %964 = vmatprep.subr.mxu0 0.0
      %965 = vmatpush1.msra.mxu0 0.0
      %966 = vmatprep.subr.mxu0 0.0
      %967 = vmatpush1.msra.mxu0 0.0
      %968 = vmatprep.subr.mxu0 0.0
      %969 = vmatpush1.msra.mxu0 0.0
      %970 = vmatprep.subr.mxu0 0.0
      %971 = vmatpush1.msra.mxu0 0.0
      %972 = vmatprep.subr.mxu0 0.0
      %973 = vmatpush1.msra.mxu0 0.0
      %974 = vmatprep.subr.mxu0 0.0
      %975 = vmatpush1.msra.mxu0 0.0
      %976 = vmatprep.subr.mxu0 0.0
      %977 = vmatpush1.msra.mxu0 0.0
      %978 = vmatprep.subr.mxu0 0.0
      %979 = vmatpush1.msra.mxu0 0.0
      %980 = vmatprep.subr.mxu0 0.0
      %981 = vmatpush1.msra.mxu0 0.0
      %982 = vmatprep.subr.mxu0 0.0
      %983 = vmatpush1.msra.mxu0 0.0
      %984 = vmatprep.subr.mxu0 0.0
      %985 = vmatpush1.msra.mxu0 0.0
      %986 = vmatprep.subr.mxu0 0.0
      %987 = vmatpush1.msra.mxu0 0.0
      %988 = vmatprep.subr.mxu0 0.0
      %989 = vmatpush1.msra.mxu0 0.0
      %990 = vmatprep.subr.mxu0 0.0
      %991 = vmatpush1.msra.mxu0 0.0
      %992 = vmatprep.subr.mxu0 0.0
      %993 = vmatpush1.msra.mxu0 0.0
      %994 = vmatprep.subr.mxu0 0.0
      %995 = vmatpush1.msra.mxu0 0.0
      %996 = vmatprep.subr.mxu0 0.0
      %997 = vmatpush1.msra.mxu0 0.0
      %998 = vmatprep.subr.mxu0 0.0
      %999 = vmatpush1.msra.mxu0 0.0
      %1000 = vmatprep.subr.mxu0 0.0
      %1001 = vmatpush1.msra.mxu0 0.0
      %1002 = vmatprep.mubr.f32.mxu0 0.0
      %1003 = vmatmul.mubr.f32.gmra.mrb[0].mxu0 %v783
      %v1004 = vpop.f32.mrb[0].mxu0
      %v1005 = vadd.f32 0.0, %v1004
      %v1006 = vpop.f32.mrb[0].mxu0
      %1007 = vmatprep.mubr.f32.mxu0 0.0
      %1008 = vmatmul.mubr.f32.gmra.mrb[0].mxu0 %v786
      %v1009 = vpop.f32.mrb[0].mxu0
      %v1010 = vadd.f32 0.0, %v1009
      %v1011 = vpop.f32.mrb[0].mxu0
      %1012 = vdwg.mxu0
      %1013 = vmatprep.subr.mxu0 0.0
      %1014 = vmatpush1.msra.mxu0 %v752
      %1015 = vmatprep.subr.mxu0 0.0
      %1016 = vmatpush1.msra.mxu0 %v757
      %1017 = vmatprep.subr.mxu0 0.0
      %1018 = vmatpush1.msra.mxu0 0.0
      %1019 = vmatprep.subr.mxu0 0.0
      %1020 = vmatpush1.msra.mxu0 0.0
      %1021 = vmatprep.subr.mxu0 0.0
      %1022 = vmatpush1.msra.mxu0 0.0
      %1023 = vmatprep.subr.mxu0 0.0
      %1024 = vmatpush1.msra.mxu0 0.0
      %1025 = vmatprep.subr.mxu0 0.0
      %1026 = vmatpush1.msra.mxu0 0.0
      %1027 = vmatprep.subr.mxu0 0.0
      %1028 = vmatpush1.msra.mxu0 0.0
      %1029 = vmatprep.subr.mxu0 0.0
      %1030 = vmatpush1.msra.mxu0 0.0
      %1031 = vmatprep.subr.mxu0 0.0
      %1032 = vmatpush1.msra.mxu0 0.0
      %1033 = vmatprep.subr.mxu0 0.0
      %1034 = vmatpush1.msra.mxu0 0.0
      %1035 = vmatprep.subr.mxu0 0.0
      %1036 = vmatpush1.msra.mxu0 0.0
      %1037 = vmatprep.subr.mxu0 0.0
      %1038 = vmatpush1.msra.mxu0 0.0
      %1039 = vmatprep.subr.mxu0 0.0
      %1040 = vmatpush1.msra.mxu0 0.0
      %1041 = vmatprep.subr.mxu0 0.0
      %1042 = vmatpush1.msra.mxu0 0.0
      %1043 = vmatprep.subr.mxu0 0.0
      %1044 = vmatpush1.msra.mxu0 0.0
      %1045 = vmatprep.subr.mxu0 0.0
      %1046 = vmatpush1.msra.mxu0 0.0
      %1047 = vmatprep.subr.mxu0 0.0
      %1048 = vmatpush1.msra.mxu0 0.0
      %1049 = vmatprep.subr.mxu0 0.0
      %1050 = vmatpush1.msra.mxu0 0.0
      %1051 = vmatprep.subr.mxu0 0.0
      %1052 = vmatpush1.msra.mxu0 0.0
      %1053 = vmatprep.subr.mxu0 0.0
      %1054 = vmatpush1.msra.mxu0 0.0
      %1055 = vmatprep.subr.mxu0 0.0
      %1056 = vmatpush1.msra.mxu0 0.0
      %1057 = vmatprep.subr.mxu0 0.0
      %1058 = vmatpush1.msra.mxu0 0.0
      %1059 = vmatprep.subr.mxu0 0.0
      %1060 = vmatpush1.msra.mxu0 0.0
      %1061 = vmatprep.subr.mxu0 0.0
      %1062 = vmatpush1.msra.mxu0 0.0
      %1063 = vmatprep.subr.mxu0 0.0
      %1064 = vmatpush1.msra.mxu0 0.0
      %1065 = vmatprep.subr.mxu0 0.0
      %1066 = vmatpush1.msra.mxu0 0.0
      %1067 = vmatprep.subr.mxu0 0.0
      %1068 = vmatpush1.msra.mxu0 0.0
      %1069 = vmatprep.subr.mxu0 0.0
      %1070 = vmatpush1.msra.mxu0 0.0
      %1071 = vmatprep.subr.mxu0 0.0
      %1072 = vmatpush1.msra.mxu0 0.0
      %1073 = vmatprep.subr.mxu0 0.0
      %1074 = vmatpush1.msra.mxu0 0.0
      %1075 = vmatprep.subr.mxu0 0.0
      %1076 = vmatpush1.msra.mxu0 0.0
      %1077 = vmatprep.mubr.f32.mxu0 0.0
      %1078 = vmatmul.mubr.f32.gmra.mrb[0].mxu0 %v783
      %v1079 = vpop.f32.mrb[0].mxu0
      %v1080 = vadd.f32 0.0, %v1079
      %v1081 = vpop.f32.mrb[0].mxu0
      %1082 = vmatprep.mubr.f32.mxu0 0.0
      %1083 = vmatmul.mubr.f32.gmra.mrb[0].mxu0 %v786
      %v1084 = vpop.f32.mrb[0].mxu0
      %v1085 = vadd.f32 0.0, %v1084
      %v1086 = vpop.f32.mrb[0].mxu0
      %1087 = vdwg.mxu0
      %1088 = vmatprep.subr.mxu0 0.0
      %1089 = vmatpush1.msra.mxu0 %v762
      %1090 = vmatprep.subr.mxu0 0.0
      %1091 = vmatpush1.msra.mxu0 %v767
      %1092 = vmatprep.subr.mxu0 0.0
      %1093 = vmatpush1.msra.mxu0 0.0
      %1094 = vmatprep.subr.mxu0 0.0
      %1095 = vmatpush1.msra.mxu0 0.0
      %1096 = vmatprep.subr.mxu0 0.0
      %1097 = vmatpush1.msra.mxu0 0.0
      %1098 = vmatprep.subr.mxu0 0.0
      %1099 = vmatpush1.msra.mxu0 0.0
      %1100 = vmatprep.subr.mxu0 0.0
      %1101 = vmatpush1.msra.mxu0 0.0
      %1102 = vmatprep.subr.mxu0 0.0
      %1103 = vmatpush1.msra.mxu0 0.0
      %1104 = vmatprep.subr.mxu0 0.0
      %1105 = vmatpush1.msra.mxu0 0.0
      %1106 = vmatprep.subr.mxu0 0.0
      %1107 = vmatpush1.msra.mxu0 0.0
      %1108 = vmatprep.subr.mxu0 0.0
      %1109 = vmatpush1.msra.mxu0 0.0
      %1110 = vmatprep.subr.mxu0 0.0
      %1111 = vmatpush1.msra.mxu0 0.0
      %1112 = vmatprep.subr.mxu0 0.0
      %1113 = vmatpush1.msra.mxu0 0.0
      %1114 = vmatprep.subr.mxu0 0.0
      %1115 = vmatpush1.msra.mxu0 0.0
      %1116 = vmatprep.subr.mxu0 0.0
      %1117 = vmatpush1.msra.mxu0 0.0
      %1118 = vmatprep.subr.mxu0 0.0
      %1119 = vmatpush1.msra.mxu0 0.0
      %1120 = vmatprep.subr.mxu0 0.0
      %1121 = vmatpush1.msra.mxu0 0.0
      %1122 = vmatprep.subr.mxu0 0.0
      %1123 = vmatpush1.msra.mxu0 0.0
      %1124 = vmatprep.subr.mxu0 0.0
      %1125 = vmatpush1.msra.mxu0 0.0
      %1126 = vmatprep.subr.mxu0 0.0
      %1127 = vmatpush1.msra.mxu0 0.0
      %1128 = vmatprep.subr.mxu0 0.0
      %1129 = vmatpush1.msra.mxu0 0.0
      %1130 = vmatprep.subr.mxu0 0.0
      %1131 = vmatpush1.msra.mxu0 0.0
      %1132 = vmatprep.subr.mxu0 0.0
      %1133 = vmatpush1.msra.mxu0 0.0
      %1134 = vmatprep.subr.mxu0 0.0
      %1135 = vmatpush1.msra.mxu0 0.0
      %1136 = vmatprep.subr.mxu0 0.0
      %1137 = vmatpush1.msra.mxu0 0.0
      %1138 = vmatprep.subr.mxu0 0.0
      %1139 = vmatpush1.msra.mxu0 0.0
      %1140 = vmatprep.subr.mxu0 0.0
      %1141 = vmatpush1.msra.mxu0 0.0
      %1142 = vmatprep.subr.mxu0 0.0
      %1143 = vmatpush1.msra.mxu0 0.0
      %1144 = vmatprep.subr.mxu0 0.0
      %1145 = vmatpush1.msra.mxu0 0.0
      %1146 = vmatprep.subr.mxu0 0.0
      %1147 = vmatpush1.msra.mxu0 0.0
      %1148 = vmatprep.subr.mxu0 0.0
      %1149 = vmatpush1.msra.mxu0 0.0
      %1150 = vmatprep.subr.mxu0 0.0
      %1151 = vmatpush1.msra.mxu0 0.0
      %1152 = vmatprep.mubr.f32.mxu0 0.0
      %1153 = vmatmul.mubr.f32.gmra.mrb[0].mxu0 %v783
      %v1154 = vpop.f32.mrb[0].mxu0
      %v1155 = vadd.f32 0.0, %v1154
      %v1156 = vpop.f32.mrb[0].mxu0
      %1157 = vmatprep.mubr.f32.mxu0 0.0
      %1158 = vmatmul.mubr.f32.gmra.mrb[0].mxu0 %v786
      %v1159 = vpop.f32.mrb[0].mxu0
      %v1160 = vadd.f32 0.0, %v1159
      %v1161 = vpop.f32.mrb[0].mxu0
      %1162 = vdwg.mxu0
      %1163 = vmatprep.subr.mxu0 0.0
      %1164 = vmatpush1.msra.mxu0 %v772
      %1165 = vmatprep.subr.mxu0 0.0
      %1166 = vmatpush1.msra.mxu0 %v777
      %1167 = vmatprep.subr.mxu0 0.0
      %1168 = vmatpush1.msra.mxu0 0.0
      %1169 = vmatprep.subr.mxu0 0.0
      %1170 = vmatpush1.msra.mxu0 0.0
      %1171 = vmatprep.subr.mxu0 0.0
      %1172 = vmatpush1.msra.mxu0 0.0
      %1173 = vmatprep.subr.mxu0 0.0
      %1174 = vmatpush1.msra.mxu0 0.0
      %1175 = vmatprep.subr.mxu0 0.0
      %1176 = vmatpush1.msra.mxu0 0.0
      %1177 = vmatprep.subr.mxu0 0.0
      %1178 = vmatpush1.msra.mxu0 0.0
      %1179 = vmatprep.subr.mxu0 0.0
      %1180 = vmatpush1.msra.mxu0 0.0
      %1181 = vmatprep.subr.mxu0 0.0
      %1182 = vmatpush1.msra.mxu0 0.0
      %1183 = vmatprep.subr.mxu0 0.0
      %1184 = vmatpush1.msra.mxu0 0.0
      %1185 = vmatprep.subr.mxu0 0.0
      %1186 = vmatpush1.msra.mxu0 0.0
      %1187 = vmatprep.subr.mxu0 0.0
      %1188 = vmatpush1.msra.mxu0 0.0
      %1189 = vmatprep.subr.mxu0 0.0
      %1190 = vmatpush1.msra.mxu0 0.0
      %1191 = vmatprep.subr.mxu0 0.0
      %1192 = vmatpush1.msra.mxu0 0.0
      %1193 = vmatprep.subr.mxu0 0.0
      %1194 = vmatpush1.msra.mxu0 0.0
      %1195 = vmatprep.subr.mxu0 0.0
      %1196 = vmatpush1.msra.mxu0 0.0
      %1197 = vmatprep.subr.mxu0 0.0
      %1198 = vmatpush1.msra.mxu0 0.0
      %1199 = vmatprep.subr.mxu0 0.0
      %1200 = vmatpush1.msra.mxu0 0.0
      %1201 = vmatprep.subr.mxu0 0.0
      %1202 = vmatpush1.msra.mxu0 0.0
      %1203 = vmatprep.subr.mxu0 0.0
      %1204 = vmatpush1.msra.mxu0 0.0
      %1205 = vmatprep.subr.mxu0 0.0
      %1206 = vmatpush1.msra.mxu0 0.0
      %1207 = vmatprep.subr.mxu0 0.0
      %1208 = vmatpush1.msra.mxu0 0.0
      %1209 = vmatprep.subr.mxu0 0.0
      %1210 = vmatpush1.msra.mxu0 0.0
      %1211 = vmatprep.subr.mxu0 0.0
      %1212 = vmatpush1.msra.mxu0 0.0
      %1213 = vmatprep.subr.mxu0 0.0
      %1214 = vmatpush1.msra.mxu0 0.0
      %1215 = vmatprep.subr.mxu0 0.0
      %1216 = vmatpush1.msra.mxu0 0.0
      %1217 = vmatprep.subr.mxu0 0.0
      %1218 = vmatpush1.msra.mxu0 0.0
      %1219 = vmatprep.subr.mxu0 0.0
      %1220 = vmatpush1.msra.mxu0 0.0
      %1221 = vmatprep.subr.mxu0 0.0
      %1222 = vmatpush1.msra.mxu0 0.0
      %1223 = vmatprep.subr.mxu0 0.0
      %1224 = vmatpush1.msra.mxu0 0.0
      %1225 = vmatprep.subr.mxu0 0.0
      %1226 = vmatpush1.msra.mxu0 0.0
      %1227 = vmatprep.mubr.f32.mxu0 0.0
      %1228 = vmatmul.mubr.f32.gmra.mrb[0].mxu0 %v783
      %v1229 = vpop.f32.mrb[0].mxu0
      %v1230 = vadd.f32 0.0, %v1229
      %v1231 = vpop.f32.mrb[0].mxu0
      %1232 = vmatprep.mubr.f32.mxu0 0.0
      %1233 = vmatmul.mubr.f32.gmra.mrb[0].mxu0 %v786
      %v1234 = vpop.f32.mrb[0].mxu0
      %v1235 = vadd.f32 0.0, %v1234
      %v1236 = vpop.f32.mrb[0].mxu0
      %1237 = vdwg.mxu0
      %1238 = vmatprep.subr.mxu0 0.0
      %1239 = vmatpush1.msra.mxu0 %v855
      %1240 = vmatprep.subr.mxu0 0.0
      %1241 = vmatpush1.msra.mxu0 %v860
      %1242 = vmatprep.subr.mxu0 0.0
      %1243 = vmatpush1.msra.mxu0 0.0
      %1244 = vmatprep.subr.mxu0 0.0
      %1245 = vmatpush1.msra.mxu0 0.0
      %1246 = vmatprep.subr.mxu0 0.0
      %1247 = vmatpush1.msra.mxu0 0.0
      %1248 = vmatprep.subr.mxu0 0.0
      %1249 = vmatpush1.msra.mxu0 0.0
      %1250 = vmatprep.subr.mxu0 0.0
      %1251 = vmatpush1.msra.mxu0 0.0
      %1252 = vmatprep.subr.mxu0 0.0
      %1253 = vmatpush1.msra.mxu0 0.0
      %1254 = vmatprep.subr.mxu0 0.0
      %1255 = vmatpush1.msra.mxu0 0.0
      %1256 = vmatprep.subr.mxu0 0.0
      %1257 = vmatpush1.msra.mxu0 0.0
      %1258 = vmatprep.subr.mxu0 0.0
      %1259 = vmatpush1.msra.mxu0 0.0
      %1260 = vmatprep.subr.mxu0 0.0
      %1261 = vmatpush1.msra.mxu0 0.0
      %1262 = vmatprep.subr.mxu0 0.0
      %1263 = vmatpush1.msra.mxu0 0.0
      %1264 = vmatprep.subr.mxu0 0.0
      %1265 = vmatpush1.msra.mxu0 0.0
      %1266 = vmatprep.subr.mxu0 0.0
      %1267 = vmatpush1.msra.mxu0 0.0
      %1268 = vmatprep.subr.mxu0 0.0
      %1269 = vmatpush1.msra.mxu0 0.0
      %1270 = vmatprep.subr.mxu0 0.0
      %1271 = vmatpush1.msra.mxu0 0.0
      %1272 = vmatprep.subr.mxu0 0.0
      %1273 = vmatpush1.msra.mxu0 0.0
      %1274 = vmatprep.subr.mxu0 0.0
      %1275 = vmatpush1.msra.mxu0 0.0
      %1276 = vmatprep.subr.mxu0 0.0
      %1277 = vmatpush1.msra.mxu0 0.0
      %1278 = vmatprep.subr.mxu0 0.0
      %1279 = vmatpush1.msra.mxu0 0.0
      %1280 = vmatprep.subr.mxu0 0.0
      %1281 = vmatpush1.msra.mxu0 0.0
      %1282 = vmatprep.subr.mxu0 0.0
      %1283 = vmatpush1.msra.mxu0 0.0
      %1284 = vmatprep.subr.mxu0 0.0
      %1285 = vmatpush1.msra.mxu0 0.0
      %1286 = vmatprep.subr.mxu0 0.0
      %1287 = vmatpush1.msra.mxu0 0.0
      %1288 = vmatprep.subr.mxu0 0.0
      %1289 = vmatpush1.msra.mxu0 0.0
      %1290 = vmatprep.subr.mxu0 0.0
      %1291 = vmatpush1.msra.mxu0 0.0
      %1292 = vmatprep.subr.mxu0 0.0
      %1293 = vmatpush1.msra.mxu0 0.0
      %1294 = vmatprep.subr.mxu0 0.0
      %1295 = vmatpush1.msra.mxu0 0.0
      %1296 = vmatprep.subr.mxu0 0.0
      %1297 = vmatpush1.msra.mxu0 0.0
      %1298 = vmatprep.subr.mxu0 0.0
      %1299 = vmatpush1.msra.mxu0 0.0
      %1300 = vmatprep.subr.mxu0 0.0
      %1301 = vmatpush1.msra.mxu0 0.0
      %1302 = vmatprep.mubr.f32.mxu0 0.0
      %1303 = vmatmul.mubr.f32.gmra.mrb[0].mxu0 %v783
      %v1304 = vpop.f32.mrb[0].mxu0
      %v1305 = vadd.f32 0.0, %v1304
      %v1306 = vpop.f32.mrb[0].mxu0
      %1307 = vmatprep.mubr.f32.mxu0 0.0
      %1308 = vmatmul.mubr.f32.gmra.mrb[0].mxu0 %v786
      %v1309 = vpop.f32.mrb[0].mxu0
      %v1310 = vadd.f32 0.0, %v1309
      %v1311 = vpop.f32.mrb[0].mxu0
      %1312 = vdwg.mxu0
      %1313 = vmatprep.subr.mxu0 0.0
      %1314 = vmatpush1.msra.mxu0 %v930
      %1315 = vmatprep.subr.mxu0 0.0
      %1316 = vmatpush1.msra.mxu0 %v935
      %1317 = vmatprep.subr.mxu0 0.0
      %1318 = vmatpush1.msra.mxu0 0.0
      %1319 = vmatprep.subr.mxu0 0.0
      %1320 = vmatpush1.msra.mxu0 0.0
      %1321 = vmatprep.subr.mxu0 0.0
      %1322 = vmatpush1.msra.mxu0 0.0
      %1323 = vmatprep.subr.mxu0 0.0
      %1324 = vmatpush1.msra.mxu0 0.0
      %1325 = vmatprep.subr.mxu0 0.0
      %1326 = vmatpush1.msra.mxu0 0.0
      %1327 = vmatprep.subr.mxu0 0.0
      %1328 = vmatpush1.msra.mxu0 0.0
      %1329 = vmatprep.subr.mxu0 0.0
      %1330 = vmatpush1.msra.mxu0 0.0
      %1331 = vmatprep.subr.mxu0 0.0
      %1332 = vmatpush1.msra.mxu0 0.0
      %1333 = vmatprep.subr.mxu0 0.0
      %1334 = vmatpush1.msra.mxu0 0.0
      %1335 = vmatprep.subr.mxu0 0.0
      %1336 = vmatpush1.msra.mxu0 0.0
      %1337 = vmatprep.subr.mxu0 0.0
      %1338 = vmatpush1.msra.mxu0 0.0
      %1339 = vmatprep.subr.mxu0 0.0
      %1340 = vmatpush1.msra.mxu0 0.0
      %1341 = vmatprep.subr.mxu0 0.0
      %1342 = vmatpush1.msra.mxu0 0.0
      %1343 = vmatprep.subr.mxu0 0.0
      %1344 = vmatpush1.msra.mxu0 0.0
      %1345 = vmatprep.subr.mxu0 0.0
      %1346 = vmatpush1.msra.mxu0 0.0
      %1347 = vmatprep.subr.mxu0 0.0
      %1348 = vmatpush1.msra.mxu0 0.0
      %1349 = vmatprep.subr.mxu0 0.0
      %1350 = vmatpush1.msra.mxu0 0.0
      %1351 = vmatprep.subr.mxu0 0.0
      %1352 = vmatpush1.msra.mxu0 0.0
      %1353 = vmatprep.subr.mxu0 0.0
      %1354 = vmatpush1.msra.mxu0 0.0
      %1355 = vmatprep.subr.mxu0 0.0
      %1356 = vmatpush1.msra.mxu0 0.0
      %1357 = vmatprep.subr.mxu0 0.0
      %1358 = vmatpush1.msra.mxu0 0.0
      %1359 = vmatprep.subr.mxu0 0.0
      %1360 = vmatpush1.msra.mxu0 0.0
      %1361 = vmatprep.subr.mxu0 0.0
      %1362 = vmatpush1.msra.mxu0 0.0
      %1363 = vmatprep.subr.mxu0 0.0
      %1364 = vmatpush1.msra.mxu0 0.0
      %1365 = vmatprep.subr.mxu0 0.0
      %1366 = vmatpush1.msra.mxu0 0.0
      %1367 = vmatprep.subr.mxu0 0.0
      %1368 = vmatpush1.msra.mxu0 0.0
      %1369 = vmatprep.subr.mxu0 0.0
      %1370 = vmatpush1.msra.mxu0 0.0
      %1371 = vmatprep.subr.mxu0 0.0
      %1372 = vmatpush1.msra.mxu0 0.0
      %1373 = vmatprep.subr.mxu0 0.0
      %1374 = vmatpush1.msra.mxu0 0.0
      %1375 = vmatprep.subr.mxu0 0.0
      %1376 = vmatpush1.msra.mxu0 0.0
      %1377 = vmatprep.mubr.f32.mxu0 0.0
      %1378 = vmatmul.mubr.f32.gmra.mrb[0].mxu0 %v783
      %v1379 = vpop.f32.mrb[0].mxu0
      %v1380 = vadd.f32 0.0, %v1379
      %v1381 = vpop.f32.mrb[0].mxu0
      %1382 = vmatprep.mubr.f32.mxu0 0.0
      %1383 = vmatmul.mubr.f32.gmra.mrb[0].mxu0 %v786
      %v1384 = vpop.f32.mrb[0].mxu0
      %v1385 = vadd.f32 0.0, %v1384
      %v1386 = vpop.f32.mrb[0].mxu0
      %1387 = vdwg.mxu0
      %1388 = vmatprep.subr.mxu0 0.0
      %1389 = vmatpush1.msra.mxu0 %v1005
      %1390 = vmatprep.subr.mxu0 0.0
      %1391 = vmatpush1.msra.mxu0 %v1010
      %1392 = vmatprep.subr.mxu0 0.0
      %1393 = vmatpush1.msra.mxu0 0.0
      %1394 = vmatprep.subr.mxu0 0.0
      %1395 = vmatpush1.msra.mxu0 0.0
      %1396 = vmatprep.subr.mxu0 0.0
      %1397 = vmatpush1.msra.mxu0 0.0
      %1398 = vmatprep.subr.mxu0 0.0
      %1399 = vmatpush1.msra.mxu0 0.0
      %1400 = vmatprep.subr.mxu0 0.0
      %1401 = vmatpush1.msra.mxu0 0.0
      %1402 = vmatprep.subr.mxu0 0.0
      %1403 = vmatpush1.msra.mxu0 0.0
      %1404 = vmatprep.subr.mxu0 0.0
      %1405 = vmatpush1.msra.mxu0 0.0
      %1406 = vmatprep.subr.mxu0 0.0
      %1407 = vmatpush1.msra.mxu0 0.0
      %1408 = vmatprep.subr.mxu0 0.0
      %1409 = vmatpush1.msra.mxu0 0.0
      %1410 = vmatprep.subr.mxu0 0.0
      %1411 = vmatpush1.msra.mxu0 0.0
      %1412 = vmatprep.subr.mxu0 0.0
      %1413 = vmatpush1.msra.mxu0 0.0
      %1414 = vmatprep.subr.mxu0 0.0
      %1415 = vmatpush1.msra.mxu0 0.0
      %1416 = vmatprep.subr.mxu0 0.0
      %1417 = vmatpush1.msra.mxu0 0.0
      %1418 = vmatprep.subr.mxu0 0.0
      %1419 = vmatpush1.msra.mxu0 0.0
      %1420 = vmatprep.subr.mxu0 0.0
      %1421 = vmatpush1.msra.mxu0 0.0
      %1422 = vmatprep.subr.mxu0 0.0
      %1423 = vmatpush1.msra.mxu0 0.0
      %1424 = vmatprep.subr.mxu0 0.0
      %1425 = vmatpush1.msra.mxu0 0.0
      %1426 = vmatprep.subr.mxu0 0.0
      %1427 = vmatpush1.msra.mxu0 0.0
      %1428 = vmatprep.subr.mxu0 0.0
      %1429 = vmatpush1.msra.mxu0 0.0
      %1430 = vmatprep.subr.mxu0 0.0
      %1431 = vmatpush1.msra.mxu0 0.0
      %1432 = vmatprep.subr.mxu0 0.0
      %1433 = vmatpush1.msra.mxu0 0.0
      %1434 = vmatprep.subr.mxu0 0.0
      %1435 = vmatpush1.msra.mxu0 0.0
      %1436 = vmatprep.subr.mxu0 0.0
      %1437 = vmatpush1.msra.mxu0 0.0
      %1438 = vmatprep.subr.mxu0 0.0
      %1439 = vmatpush1.msra.mxu0 0.0
      %1440 = vmatprep.subr.mxu0 0.0
      %1441 = vmatpush1.msra.mxu0 0.0
      %1442 = vmatprep.subr.mxu0 0.0
      %1443 = vmatpush1.msra.mxu0 0.0
      %1444 = vmatprep.subr.mxu0 0.0
      %1445 = vmatpush1.msra.mxu0 0.0
      %1446 = vmatprep.subr.mxu0 0.0
      %1447 = vmatpush1.msra.mxu0 0.0
      %1448 = vmatprep.subr.mxu0 0.0
      %1449 = vmatpush1.msra.mxu0 0.0
      %1450 = vmatprep.subr.mxu0 0.0
      %1451 = vmatpush1.msra.mxu0 0.0
      %1452 = vmatprep.mubr.f32.mxu0 0.0
      %1453 = vmatmul.mubr.f32.gmra.mrb[0].mxu0 %v783
      %v1454 = vpop.f32.mrb[0].mxu0
      %v1455 = vadd.f32 0.0, %v1454
      %v1456 = vpop.f32.mrb[0].mxu0
      %1457 = vmatprep.mubr.f32.mxu0 0.0
      %1458 = vmatmul.mubr.f32.gmra.mrb[0].mxu0 %v786
      %v1459 = vpop.f32.mrb[0].mxu0
      %v1460 = vadd.f32 0.0, %v1459
      %v1461 = vpop.f32.mrb[0].mxu0
      %1462 = vdwg.mxu0
      %1463 = vmatprep.subr.mxu0 0.0
      %1464 = vmatpush1.msra.mxu0 %v1080
      %1465 = vmatprep.subr.mxu0 0.0
      %1466 = vmatpush1.msra.mxu0 %v1085
      %1467 = vmatprep.subr.mxu0 0.0
      %1468 = vmatpush1.msra.mxu0 0.0
      %1469 = vmatprep.subr.mxu0 0.0
      %1470 = vmatpush1.msra.mxu0 0.0
      %1471 = vmatprep.subr.mxu0 0.0
      %1472 = vmatpush1.msra.mxu0 0.0
      %1473 = vmatprep.subr.mxu0 0.0
      %1474 = vmatpush1.msra.mxu0 0.0
      %1475 = vmatprep.subr.mxu0 0.0
      %1476 = vmatpush1.msra.mxu0 0.0
      %1477 = vmatprep.subr.mxu0 0.0
      %1478 = vmatpush1.msra.mxu0 0.0
      %1479 = vmatprep.subr.mxu0 0.0
      %1480 = vmatpush1.msra.mxu0 0.0
      %1481 = vmatprep.subr.mxu0 0.0
      %1482 = vmatpush1.msra.mxu0 0.0
      %1483 = vmatprep.subr.mxu0 0.0
      %1484 = vmatpush1.msra.mxu0 0.0
      %1485 = vmatprep.subr.mxu0 0.0
      %1486 = vmatpush1.msra.mxu0 0.0
      %1487 = vmatprep.subr.mxu0 0.0
      %1488 = vmatpush1.msra.mxu0 0.0
      %1489 = vmatprep.subr.mxu0 0.0
      %1490 = vmatpush1.msra.mxu0 0.0
      %1491 = vmatprep.subr.mxu0 0.0
      %1492 = vmatpush1.msra.mxu0 0.0
      %1493 = vmatprep.subr.mxu0 0.0
      %1494 = vmatpush1.msra.mxu0 0.0
      %1495 = vmatprep.subr.mxu0 0.0
      %1496 = vmatpush1.msra.mxu0 0.0
      %1497 = vmatprep.subr.mxu0 0.0
      %1498 = vmatpush1.msra.mxu0 0.0
      %1499 = vmatprep.subr.mxu0 0.0
      %1500 = vmatpush1.msra.mxu0 0.0
      %1501 = vmatprep.subr.mxu0 0.0
      %1502 = vmatpush1.msra.mxu0 0.0
      %1503 = vmatprep.subr.mxu0 0.0
      %1504 = vmatpush1.msra.mxu0 0.0
      %1505 = vmatprep.subr.mxu0 0.0
      %1506 = vmatpush1.msra.mxu0 0.0
      %1507 = vmatprep.subr.mxu0 0.0
      %1508 = vmatpush1.msra.mxu0 0.0
      %1509 = vmatprep.subr.mxu0 0.0
      %1510 = vmatpush1.msra.mxu0 0.0
      %1511 = vmatprep.subr.mxu0 0.0
      %1512 = vmatpush1.msra.mxu0 0.0
      %1513 = vmatprep.subr.mxu0 0.0
      %1514 = vmatpush1.msra.mxu0 0.0
      %1515 = vmatprep.subr.mxu0 0.0
      %1516 = vmatpush1.msra.mxu0 0.0
      %1517 = vmatprep.subr.mxu0 0.0
      %1518 = vmatpush1.msra.mxu0 0.0
      %1519 = vmatprep.subr.mxu0 0.0
      %1520 = vmatpush1.msra.mxu0 0.0
      %1521 = vmatprep.subr.mxu0 0.0
      %1522 = vmatpush1.msra.mxu0 0.0
      %1523 = vmatprep.subr.mxu0 0.0
      %1524 = vmatpush1.msra.mxu0 0.0
      %1525 = vmatprep.subr.mxu0 0.0
      %1526 = vmatpush1.msra.mxu0 0.0
      %1527 = vmatprep.mubr.f32.mxu0 0.0
      %1528 = vmatmul.mubr.f32.gmra.mrb[0].mxu0 %v783
      %v1529 = vpop.f32.mrb[0].mxu0
      %v1530 = vadd.f32 0.0, %v1529
      %v1531 = vpop.f32.mrb[0].mxu0
      %1532 = vmatprep.mubr.f32.mxu0 0.0
      %1533 = vmatmul.mubr.f32.gmra.mrb[0].mxu0 %v786
      %v1534 = vpop.f32.mrb[0].mxu0
      %v1535 = vadd.f32 0.0, %v1534
      %v1536 = vpop.f32.mrb[0].mxu0
      %1537 = vdwg.mxu0
      %1538 = vmatprep.subr.mxu0 0.0
      %1539 = vmatpush1.msra.mxu0 %v1155
      %1540 = vmatprep.subr.mxu0 0.0
      %1541 = vmatpush1.msra.mxu0 %v1160
      %1542 = vmatprep.subr.mxu0 0.0
      %1543 = vmatpush1.msra.mxu0 0.0
      %1544 = vmatprep.subr.mxu0 0.0
      %1545 = vmatpush1.msra.mxu0 0.0
      %1546 = vmatprep.subr.mxu0 0.0
      %1547 = vmatpush1.msra.mxu0 0.0
      %1548 = vmatprep.subr.mxu0 0.0
      %1549 = vmatpush1.msra.mxu0 0.0
      %1550 = vmatprep.subr.mxu0 0.0
      %1551 = vmatpush1.msra.mxu0 0.0
      %1552 = vmatprep.subr.mxu0 0.0
      %1553 = vmatpush1.msra.mxu0 0.0
      %1554 = vmatprep.subr.mxu0 0.0
      %1555 = vmatpush1.msra.mxu0 0.0
      %1556 = vmatprep.subr.mxu0 0.0
      %1557 = vmatpush1.msra.mxu0 0.0
      %1558 = vmatprep.subr.mxu0 0.0
      %1559 = vmatpush1.msra.mxu0 0.0
      %1560 = vmatprep.subr.mxu0 0.0
      %1561 = vmatpush1.msra.mxu0 0.0
      %1562 = vmatprep.subr.mxu0 0.0
      %1563 = vmatpush1.msra.mxu0 0.0
      %1564 = vmatprep.subr.mxu0 0.0
      %1565 = vmatpush1.msra.mxu0 0.0
      %1566 = vmatprep.subr.mxu0 0.0
      %1567 = vmatpush1.msra.mxu0 0.0
      %1568 = vmatprep.subr.mxu0 0.0
      %1569 = vmatpush1.msra.mxu0 0.0
      %1570 = vmatprep.subr.mxu0 0.0
      %1571 = vmatpush1.msra.mxu0 0.0
      %1572 = vmatprep.subr.mxu0 0.0
      %1573 = vmatpush1.msra.mxu0 0.0
      %1574 = vmatprep.subr.mxu0 0.0
      %1575 = vmatpush1.msra.mxu0 0.0
      %1576 = vmatprep.subr.mxu0 0.0
      %1577 = vmatpush1.msra.mxu0 0.0
      %1578 = vmatprep.subr.mxu0 0.0
      %1579 = vmatpush1.msra.mxu0 0.0
      %1580 = vmatprep.subr.mxu0 0.0
      %1581 = vmatpush1.msra.mxu0 0.0
      %1582 = vmatprep.subr.mxu0 0.0
      %1583 = vmatpush1.msra.mxu0 0.0
      %1584 = vmatprep.subr.mxu0 0.0
      %1585 = vmatpush1.msra.mxu0 0.0
      %1586 = vmatprep.subr.mxu0 0.0
      %1587 = vmatpush1.msra.mxu0 0.0
      %1588 = vmatprep.subr.mxu0 0.0
      %1589 = vmatpush1.msra.mxu0 0.0
      %1590 = vmatprep.subr.mxu0 0.0
      %1591 = vmatpush1.msra.mxu0 0.0
      %1592 = vmatprep.subr.mxu0 0.0
      %1593 = vmatpush1.msra.mxu0 0.0
      %1594 = vmatprep.subr.mxu0 0.0
      %1595 = vmatpush1.msra.mxu0 0.0
      %1596 = vmatprep.subr.mxu0 0.0
      %1597 = vmatpush1.msra.mxu0 0.0
      %1598 = vmatprep.subr.mxu0 0.0
      %1599 = vmatpush1.msra.mxu0 0.0
      %1600 = vmatprep.subr.mxu0 0.0
      %1601 = vmatpush1.msra.mxu0 0.0
      %1602 = vmatprep.mubr.f32.mxu0 0.0
      %1603 = vmatmul.mubr.f32.gmra.mrb[0].mxu0 %v783
      %v1604 = vpop.f32.mrb[0].mxu0
      %v1605 = vadd.f32 0.0, %v1604
      %v1606 = vpop.f32.mrb[0].mxu0
      %1607 = vmatprep.mubr.f32.mxu0 0.0
      %1608 = vmatmul.mubr.f32.gmra.mrb[0].mxu0 %v786
      %v1609 = vpop.f32.mrb[0].mxu0
      %v1610 = vadd.f32 0.0, %v1609
      %v1611 = vpop.f32.mrb[0].mxu0
      %1612 = vdwg.mxu0
      %1613 = vmatprep.subr.mxu0 0.0
      %1614 = vmatpush1.msra.mxu0 %v1230
      %1615 = vmatprep.subr.mxu0 0.0
      %1616 = vmatpush1.msra.mxu0 %v1235
      %1617 = vmatprep.subr.mxu0 0.0
      %1618 = vmatpush1.msra.mxu0 0.0
      %1619 = vmatprep.subr.mxu0 0.0
      %1620 = vmatpush1.msra.mxu0 0.0
      %1621 = vmatprep.subr.mxu0 0.0
      %1622 = vmatpush1.msra.mxu0 0.0
      %1623 = vmatprep.subr.mxu0 0.0
      %1624 = vmatpush1.msra.mxu0 0.0
      %1625 = vmatprep.subr.mxu0 0.0
      %1626 = vmatpush1.msra.mxu0 0.0
      %1627 = vmatprep.subr.mxu0 0.0
      %1628 = vmatpush1.msra.mxu0 0.0
      %1629 = vmatprep.subr.mxu0 0.0
      %1630 = vmatpush1.msra.mxu0 0.0
      %1631 = vmatprep.subr.mxu0 0.0
      %1632 = vmatpush1.msra.mxu0 0.0
      %1633 = vmatprep.subr.mxu0 0.0
      %1634 = vmatpush1.msra.mxu0 0.0
      %1635 = vmatprep.subr.mxu0 0.0
      %1636 = vmatpush1.msra.mxu0 0.0
      %1637 = vmatprep.subr.mxu0 0.0
      %1638 = vmatpush1.msra.mxu0 0.0
      %1639 = vmatprep.subr.mxu0 0.0
      %1640 = vmatpush1.msra.mxu0 0.0
      %1641 = vmatprep.subr.mxu0 0.0
      %1642 = vmatpush1.msra.mxu0 0.0
      %1643 = vmatprep.subr.mxu0 0.0
      %1644 = vmatpush1.msra.mxu0 0.0
      %1645 = vmatprep.subr.mxu0 0.0
      %1646 = vmatpush1.msra.mxu0 0.0
      %1647 = vmatprep.subr.mxu0 0.0
      %1648 = vmatpush1.msra.mxu0 0.0
      %1649 = vmatprep.subr.mxu0 0.0
      %1650 = vmatpush1.msra.mxu0 0.0
      %1651 = vmatprep.subr.mxu0 0.0
      %1652 = vmatpush1.msra.mxu0 0.0
      %1653 = vmatprep.subr.mxu0 0.0
      %1654 = vmatpush1.msra.mxu0 0.0
      %1655 = vmatprep.subr.mxu0 0.0
      %1656 = vmatpush1.msra.mxu0 0.0
      %1657 = vmatprep.subr.mxu0 0.0
      %1658 = vmatpush1.msra.mxu0 0.0
      %1659 = vmatprep.subr.mxu0 0.0
      %1660 = vmatpush1.msra.mxu0 0.0
      %1661 = vmatprep.subr.mxu0 0.0
      %1662 = vmatpush1.msra.mxu0 0.0
      %1663 = vmatprep.subr.mxu0 0.0
      %1664 = vmatpush1.msra.mxu0 0.0
      %1665 = vmatprep.subr.mxu0 0.0
      %1666 = vmatpush1.msra.mxu0 0.0
      %1667 = vmatprep.subr.mxu0 0.0
      %1668 = vmatpush1.msra.mxu0 0.0
      %1669 = vmatprep.subr.mxu0 0.0
      %1670 = vmatpush1.msra.mxu0 0.0
      %1671 = vmatprep.subr.mxu0 0.0
      %1672 = vmatpush1.msra.mxu0 0.0
      %1673 = vmatprep.subr.mxu0 0.0
      %1674 = vmatpush1.msra.mxu0 0.0
      %1675 = vmatprep.subr.mxu0 0.0
      %1676 = vmatpush1.msra.mxu0 0.0
      %1677 = vmatprep.mubr.f32.mxu0 0.0
      %1678 = vmatmul.mubr.f32.gmra.mrb[0].mxu0 %v783
      %v1679 = vpop.f32.mrb[0].mxu0
      %v1680 = vadd.f32 0.0, %v1679
      %v1681 = vpop.f32.mrb[0].mxu0
      %1682 = vmatprep.mubr.f32.mxu0 0.0
      %1683 = vmatmul.mubr.f32.gmra.mrb[0].mxu0 %v786
      %v1684 = vpop.f32.mrb[0].mxu0
      %v1685 = vadd.f32 0.0, %v1684
      %v1686 = vpop.f32.mrb[0].mxu0
      %1687 = vdwg.mxu0
      %v1688 = vmul.f32 %v1305, 2.0
      %v1689 = vmul.f32 %v1310, 2.0
      %v1690 = vmul.f32 %v1380, 2.0
      %v1691 = vmul.f32 %v1385, 2.0
      %v1692 = vmul.f32 %v1455, 2.0
      %v1693 = vmul.f32 %v1460, 2.0
      %v1694 = vmul.f32 %v1530, 2.0
      %v1695 = vmul.f32 %v1535, 2.0
      %v1696 = vmul.f32 %v1605, 2.0
      %v1697 = vmul.f32 %v1610, 2.0
      %v1698 = vmul.f32 %v1680, 2.0
      %v1699 = vmul.f32 %v1685, 2.0
      %v1700 = vsub.f32 %v1688, %v722
      %v1701 = vsub.f32 %v1689, %v727
      %v1702 = vsub.f32 %v1690, %v732
      %v1703 = vsub.f32 %v1691, %v737
      %v1704 = vsub.f32 %v1692, %v742
      %v1705 = vsub.f32 %v1693, %v747
      %v1706 = vsub.f32 %v1694, %v752
      %v1707 = vsub.f32 %v1695, %v757
      %v1708 = vsub.f32 %v1696, %v762
      %v1709 = vsub.f32 %v1697, %v767
      %v1710 = vsub.f32 %v1698, %v772
      %v1711 = vsub.f32 %v1699, %v777
      %1724 = vrot.lane.b32.xlu0 %v855, 4
      %v1725 = vpop.permute.xlu0 %1724
      %1726 = vrot.lane.b32.xlu0 %v860, 4
      %v1727 = vpop.permute.xlu0 %1726
      %1728 = vrot.lane.b32.xlu0 %v930, 4
      %v1729 = vpop.permute.xlu0 %1728
      %1730 = vrot.lane.b32.xlu0 %v935, 4
      %v1731 = vpop.permute.xlu0 %1730
      %1732 = vrot.lane.b32.xlu0 %v1005, 4
      %v1733 = vpop.permute.xlu0 %1732
      %1734 = vrot.lane.b32.xlu0 %v1010, 4
      %v1735 = vpop.permute.xlu0 %1734
      %1736 = vrot.lane.b32.xlu0 %v1080, 4
      %v1737 = vpop.permute.xlu0 %1736
      %1738 = vrot.lane.b32.xlu0 %v1085, 4
      %v1739 = vpop.permute.xlu0 %1738
      %1740 = vrot.lane.b32.xlu0 %v1155, 4
      %v1741 = vpop.permute.xlu0 %1740
      %1742 = vrot.lane.b32.xlu0 %v1160, 4
      %v1743 = vpop.permute.xlu0 %1742
      %1744 = vrot.lane.b32.xlu0 %v1230, 4
      %v1745 = vpop.permute.xlu0 %1744
      %1746 = vrot.lane.b32.xlu0 %v1235, 4
      %v1747 = vpop.permute.xlu0 %1746
      %1772 = vrot.lane.b32.xlu0 %v1700, 8
      %v1773 = vpop.permute.xlu0 %1772
      %1774 = vrot.lane.b32.xlu0 %v1701, 8
      %v1775 = vpop.permute.xlu0 %1774
      %1776 = vrot.lane.b32.xlu0 %v1702, 8
      %v1777 = vpop.permute.xlu0 %1776
      %1778 = vrot.lane.b32.xlu0 %v1703, 8
      %v1779 = vpop.permute.xlu0 %1778
      %1780 = vrot.lane.b32.xlu0 %v1704, 8
      %v1781 = vpop.permute.xlu0 %1780
      %1782 = vrot.lane.b32.xlu0 %v1705, 8
      %v1783 = vpop.permute.xlu0 %1782
      %1784 = vrot.lane.b32.xlu0 %v1706, 8
      %v1785 = vpop.permute.xlu0 %1784
      %1786 = vrot.lane.b32.xlu0 %v1707, 8
      %v1787 = vpop.permute.xlu0 %1786
      %1788 = vrot.lane.b32.xlu0 %v1708, 8
      %v1789 = vpop.permute.xlu0 %1788
      %1790 = vrot.lane.b32.xlu0 %v1709, 8
      %v1791 = vpop.permute.xlu0 %1790
      %1792 = vrot.lane.b32.xlu0 %v1710, 8
      %v1793 = vpop.permute.xlu0 %1792
      %1794 = vrot.lane.b32.xlu0 %v1711, 8
      %v1795 = vpop.permute.xlu0 %1794
      %vm1808 = vcmask 31744
      %v1809 = vsel %vm1808, %v722, %v1725
      %v1810 = vsel %vm1808, %v727, %v1727
      %v1811 = vsel %vm1808, %v732, %v1729
      %v1812 = vsel %vm1808, %v737, %v1731
      %v1813 = vsel %vm1808, %v742, %v1733
      %v1814 = vsel %vm1808, %v747, %v1735
      %v1815 = vsel %vm1808, %v752, %v1737
      %v1816 = vsel %vm1808, %v757, %v1739
      %v1817 = vsel %vm1808, %v762, %v1741
      %v1818 = vsel %vm1808, %v767, %v1743
      %v1819 = vsel %vm1808, %v772, %v1745
      %v1820 = vsel %vm1808, %v777, %v1747
      %v1821 = vsel %vm273, %v1809, %v1773
      %v1822 = vsel %vm273, %v1810, %v1775
      %v1823 = vsel %vm273, %v1811, %v1777
      %v1824 = vsel %vm273, %v1812, %v1779
      %v1825 = vsel %vm273, %v1813, %v1781
      %v1826 = vsel %vm273, %v1814, %v1783
      %v1827 = vsel %vm273, %v1815, %v1785
      %v1828 = vsel %vm273, %v1816, %v1787
      %v1829 = vsel %vm273, %v1817, %v1789
      %v1830 = vsel %vm273, %v1818, %v1791
      %v1831 = vsel %vm273, %v1819, %v1793
      %v1832 = vsel %vm273, %v1820, %v1795
      %v1833 = vld [vmem:[%s2 + $0x30] sm:$0xff]
      %v1834 = vld [vmem:[%s2 + $0x38] sm:$0xf]
      %v1835 = vld [vmem:[%s2 + $0x40] sm:$0x1]
      %v1836 = vlaneseq
      %v1837 = vshrl.u32 %v1836, 7
      %v1838 = vsub.s32 0, %v1837
      %v1839 = vrot.slane %v1835, %v1838
      %vm1840 = vcmask 97280
      %v1842 = vsel %vm1840, %v1821, 0
      %v1845 = vsel %vm1840, %v1822, 0
      %v1848 = vsel %vm1840, %v1823, 0
      %v1851 = vsel %vm1840, %v1824, 0
      %v1854 = vsel %vm1840, %v1825, 0
      %v1857 = vsel %vm1840, %v1826, 0
      %v1860 = vsel %vm1840, %v1827, 0
      %v1863 = vsel %vm1840, %v1828, 0
      %v1866 = vsel %vm1840, %v1829, 0
      %v1869 = vsel %vm1840, %v1830, 0
      %v1872 = vsel %vm1840, %v1831, 0
      %v1875 = vsel %vm1840, %v1832, 0
      %vm1877 = vcmask 1043456
      %v1879 = vsel %vm1877, %v1834, 0
      %1881 = vmatprep.subr.mxu0 0.0
      %1882 = vmatpush1.msra.mxu0 %v1833
      %1883 = vmatprep.subr.mxu0 0.0
      %1884 = vmatpush1.msra.mxu0 %v1879
      %1885 = vmatprep.subr.mxu0 0.0
      %1886 = vmatpush1.msra.mxu0 0.0
      %1887 = vmatprep.subr.mxu0 0.0
      %1888 = vmatpush1.msra.mxu0 0.0
      %1889 = vmatprep.subr.mxu0 0.0
      %1890 = vmatpush1.msra.mxu0 0.0
      %1891 = vmatprep.subr.mxu0 0.0
      %1892 = vmatpush1.msra.mxu0 0.0
      %1893 = vmatprep.subr.mxu0 0.0
      %1894 = vmatpush1.msra.mxu0 0.0
      %1895 = vmatprep.subr.mxu0 0.0
      %1896 = vmatpush1.msra.mxu0 0.0
      %1897 = vmatprep.subr.mxu0 0.0
      %1898 = vmatpush1.msra.mxu0 0.0
      %1899 = vmatprep.subr.mxu0 0.0
      %1900 = vmatpush1.msra.mxu0 0.0
      %1901 = vmatprep.subr.mxu0 0.0
      %1902 = vmatpush1.msra.mxu0 0.0
      %1903 = vmatprep.subr.mxu0 0.0
      %1904 = vmatpush1.msra.mxu0 0.0
      %1905 = vmatprep.subr.mxu0 0.0
      %1906 = vmatpush1.msra.mxu0 0.0
      %1907 = vmatprep.subr.mxu0 0.0
      %1908 = vmatpush1.msra.mxu0 0.0
      %1909 = vmatprep.subr.mxu0 0.0
      %1910 = vmatpush1.msra.mxu0 0.0
      %1911 = vmatprep.subr.mxu0 0.0
      %1912 = vmatpush1.msra.mxu0 0.0
      %1913 = vmatprep.subr.mxu0 0.0
      %1914 = vmatpush1.msra.mxu0 0.0
      %1915 = vmatprep.subr.mxu0 0.0
      %1916 = vmatpush1.msra.mxu0 0.0
      %1917 = vmatprep.subr.mxu0 0.0
      %1918 = vmatpush1.msra.mxu0 0.0
      %1919 = vmatprep.subr.mxu0 0.0
      %1920 = vmatpush1.msra.mxu0 0.0
      %1921 = vmatprep.subr.mxu0 0.0
      %1922 = vmatpush1.msra.mxu0 0.0
      %1923 = vmatprep.subr.mxu0 0.0
      %1924 = vmatpush1.msra.mxu0 0.0
      %1925 = vmatprep.subr.mxu0 0.0
      %1926 = vmatpush1.msra.mxu0 0.0
      %1927 = vmatprep.subr.mxu0 0.0
      %1928 = vmatpush1.msra.mxu0 0.0
      %1929 = vmatprep.subr.mxu0 0.0
      %1930 = vmatpush1.msra.mxu0 0.0
      %1931 = vmatprep.subr.mxu0 0.0
      %1932 = vmatpush1.msra.mxu0 0.0
      %1933 = vmatprep.subr.mxu0 0.0
      %1934 = vmatpush1.msra.mxu0 0.0
      %1935 = vmatprep.subr.mxu0 0.0
      %1936 = vmatpush1.msra.mxu0 0.0
      %1937 = vmatprep.subr.mxu0 0.0
      %1938 = vmatpush1.msra.mxu0 0.0
      %1939 = vmatprep.subr.mxu0 0.0
      %1940 = vmatpush1.msra.mxu0 0.0
      %1941 = vmatprep.subr.mxu0 0.0
      %1942 = vmatpush1.msra.mxu0 0.0
      %1943 = vmatprep.subr.mxu0 0.0
      %1944 = vmatpush1.msra.mxu0 0.0
      %1945 = vmatprep.mubr.f32.mxu0 0.0
      %1946 = vmatmul.mubr.f32.gmra.mrb[0].mxu0 %v1842
      %v1947 = vpop.f32.mrb[0].mxu0
      %v1948 = vadd.f32 %v1839, %v1947
      %v1949 = vpop.f32.mrb[0].mxu0
      %1950 = vmatprep.mubr.f32.mxu0 0.0
      %1951 = vmatmul.mubr.f32.gmra.mrb[0].mxu0 %v1845
      %v1952 = vpop.f32.mrb[0].mxu0
      %v1953 = vadd.f32 %v1839, %v1952
      %v1954 = vpop.f32.mrb[0].mxu0
      %1955 = vmatprep.mubr.f32.mxu0 0.0
      %1956 = vmatmul.mubr.f32.gmra.mrb[0].mxu0 %v1848
      %v1957 = vpop.f32.mrb[0].mxu0
      %v1958 = vadd.f32 %v1839, %v1957
      %v1959 = vpop.f32.mrb[0].mxu0
      %1960 = vmatprep.mubr.f32.mxu0 0.0
      %1961 = vmatmul.mubr.f32.gmra.mrb[0].mxu0 %v1851
      %v1962 = vpop.f32.mrb[0].mxu0
      %v1963 = vadd.f32 %v1839, %v1962
      %v1964 = vpop.f32.mrb[0].mxu0
      %1965 = vmatprep.mubr.f32.mxu0 0.0
      %1966 = vmatmul.mubr.f32.gmra.mrb[0].mxu0 %v1854
      %v1967 = vpop.f32.mrb[0].mxu0
      %v1968 = vadd.f32 %v1839, %v1967
      %v1969 = vpop.f32.mrb[0].mxu0
      %1970 = vmatprep.mubr.f32.mxu0 0.0
      %1971 = vmatmul.mubr.f32.gmra.mrb[0].mxu0 %v1857
      %v1972 = vpop.f32.mrb[0].mxu0
      %v1973 = vadd.f32 %v1839, %v1972
      %v1974 = vpop.f32.mrb[0].mxu0
      %1975 = vmatprep.mubr.f32.mxu0 0.0
      %1976 = vmatmul.mubr.f32.gmra.mrb[0].mxu0 %v1860
      %v1977 = vpop.f32.mrb[0].mxu0
      %v1978 = vadd.f32 %v1839, %v1977
      %v1979 = vpop.f32.mrb[0].mxu0
      %1980 = vmatprep.mubr.f32.mxu0 0.0
      %1981 = vmatmul.mubr.f32.gmra.mrb[0].mxu0 %v1863
      %v1982 = vpop.f32.mrb[0].mxu0
      %v1983 = vadd.f32 %v1839, %v1982
      %v1984 = vpop.f32.mrb[0].mxu0
      %1985 = vmatprep.mubr.f32.mxu0 0.0
      %1986 = vmatmul.mubr.f32.gmra.mrb[0].mxu0 %v1866
      %v1987 = vpop.f32.mrb[0].mxu0
      %v1988 = vadd.f32 %v1839, %v1987
      %v1989 = vpop.f32.mrb[0].mxu0
      %1990 = vmatprep.mubr.f32.mxu0 0.0
      %1991 = vmatmul.mubr.f32.gmra.mrb[0].mxu0 %v1869
      %v1992 = vpop.f32.mrb[0].mxu0
      %v1993 = vadd.f32 %v1839, %v1992
      %v1994 = vpop.f32.mrb[0].mxu0
      %1995 = vmatprep.mubr.f32.mxu0 0.0
      %1996 = vmatmul.mubr.f32.gmra.mrb[0].mxu0 %v1872
      %v1997 = vpop.f32.mrb[0].mxu0
      %v1998 = vadd.f32 %v1839, %v1997
      %v1999 = vpop.f32.mrb[0].mxu0
      %2000 = vmatprep.mubr.f32.mxu0 0.0
      %2001 = vmatmul.mubr.f32.gmra.mrb[0].mxu0 %v1875
      %v2002 = vpop.f32.mrb[0].mxu0
      %v2003 = vadd.f32 %v1839, %v2002
      %v2004 = vpop.f32.mrb[0].mxu0
      %2005 = vdwg.mxu0
      %v2006 = vadd.f32 %v1948, %v722
      %v2007 = vadd.f32 %v1953, %v727
      %v2008 = vadd.f32 %v1958, %v732
      %v2009 = vadd.f32 %v1963, %v737
      %v2010 = vadd.f32 %v1968, %v742
      %v2011 = vadd.f32 %v1973, %v747
      %v2012 = vadd.f32 %v1978, %v752
      %v2013 = vadd.f32 %v1983, %v757
      %v2014 = vadd.f32 %v1988, %v762
      %v2015 = vadd.f32 %v1993, %v767
      %v2016 = vadd.f32 %v1998, %v772
      %v2017 = vadd.f32 %v2003, %v777
      %v2018 = vmax.f32 %v2006, 0.0
      %v2019 = vmax.f32 %v2007, 0.0
      %v2020 = vmax.f32 %v2008, 0.0
      %v2021 = vmax.f32 %v2009, 0.0
      %v2022 = vmax.f32 %v2010, 0.0
      %v2023 = vmax.f32 %v2011, 0.0
      %v2024 = vmax.f32 %v2012, 0.0
      %v2025 = vmax.f32 %v2013, 0.0
      %v2026 = vmax.f32 %v2014, 0.0
      %v2027 = vmax.f32 %v2015, 0.0
      %v2028 = vmax.f32 %v2016, 0.0
      %v2029 = vmax.f32 %v2017, 0.0
      %v2030 = vsel %vm1808, %v2022, 0.0
      %v2031 = vsel %vm1808, %v2023, 0.0
      %v2032 = vsel %vm1808, %v2024, 0.0
      %v2033 = vsel %vm1808, %v2025, 0.0
      %v2034 = vsel %vm1808, %v2026, 0.0
      %v2035 = vsel %vm1808, %v2027, 0.0
      %v2036 = vsel %vm1808, %v2028, 0.0
      %v2037 = vsel %vm1808, %v2029, 0.0
      %2046 = vrot.lane.b32.xlu0 %v2020, 4
      %v2047 = vpop.permute.xlu0 %2046
      %2048 = vrot.lane.b32.xlu0 %v2021, 4
      %v2049 = vpop.permute.xlu0 %2048
      %2050 = vrot.lane.b32.xlu0 %v2022, 4
      %v2051 = vpop.permute.xlu0 %2050
      %2052 = vrot.lane.b32.xlu0 %v2023, 4
      %v2053 = vpop.permute.xlu0 %2052
      %2054 = vrot.lane.b32.xlu0 %v2024, 4
      %v2055 = vpop.permute.xlu0 %2054
      %2056 = vrot.lane.b32.xlu0 %v2025, 4
      %v2057 = vpop.permute.xlu0 %2056
      %2058 = vrot.lane.b32.xlu0 %v2026, 4
      %v2059 = vpop.permute.xlu0 %2058
      %2060 = vrot.lane.b32.xlu0 %v2027, 4
      %v2061 = vpop.permute.xlu0 %2060
      %2072 = vrot.lane.b32.xlu0 %v2022, 8
      %v2073 = vpop.permute.xlu0 %2072
      %2074 = vrot.lane.b32.xlu0 %v2023, 8
      %v2075 = vpop.permute.xlu0 %2074
      %2076 = vrot.lane.b32.xlu0 %v2024, 8
      %v2077 = vpop.permute.xlu0 %2076
      %2078 = vrot.lane.b32.xlu0 %v2025, 8
      %v2079 = vpop.permute.xlu0 %2078
      %2080 = vrot.lane.b32.xlu0 %v2026, 8
      %v2081 = vpop.permute.xlu0 %2080
      %2082 = vrot.lane.b32.xlu0 %v2027, 8
      %v2083 = vpop.permute.xlu0 %2082
      %2084 = vrot.lane.b32.xlu0 %v2028, 8
      %v2085 = vpop.permute.xlu0 %2084
      %2086 = vrot.lane.b32.xlu0 %v2029, 8
      %v2087 = vpop.permute.xlu0 %2086
      %v2096 = vsel %vm1808, %v2018, %v2047
      %v2097 = vsel %vm1808, %v2019, %v2049
      %v2098 = vsel %vm1808, %v2020, %v2051
      %v2099 = vsel %vm1808, %v2021, %v2053
      %v2100 = vsel %vm1808, %v2022, %v2055
      %v2101 = vsel %vm1808, %v2023, %v2057
      %v2102 = vsel %vm1808, %v2024, %v2059
      %v2103 = vsel %vm1808, %v2025, %v2061
      %v2104 = vsel %vm273, %v2096, %v2073
      %v2105 = vsel %vm273, %v2097, %v2075
      %v2106 = vsel %vm273, %v2098, %v2077
      %v2107 = vsel %vm273, %v2099, %v2079
      %v2108 = vsel %vm273, %v2100, %v2081
      %v2109 = vsel %vm273, %v2101, %v2083
      %v2110 = vsel %vm273, %v2102, %v2085
      %v2111 = vsel %vm273, %v2103, %v2087
      %v2112 = vld [vmem:[%s2 + $0x48] sm:$0xff]
      %v2113 = vld [vmem:[%s2 + $0x50] sm:$0xf]
      %v2114 = vld [vmem:[%s2 + $0x58] sm:$0x1]
      %v2115 = vlaneseq
      %v2116 = vshrl.u32 %v2115, 7
      %v2117 = vsub.s32 0, %v2116
      %v2118 = vrot.slane %v2114, %v2117
      %v2120 = vsel %vm1840, %v2104, 0
      %v2123 = vsel %vm1840, %v2105, 0
      %v2126 = vsel %vm1840, %v2106, 0
      %v2129 = vsel %vm1840, %v2107, 0
      %v2132 = vsel %vm1840, %v2108, 0
      %v2135 = vsel %vm1840, %v2109, 0
      %v2138 = vsel %vm1840, %v2110, 0
      %v2141 = vsel %vm1840, %v2111, 0
      %v2144 = vsel %vm1877, %v2113, 0
      %2146 = vmatprep.subr.mxu0 0.0
      %2147 = vmatpush1.msra.mxu0 %v2112
      %2148 = vmatprep.subr.mxu0 0.0
      %2149 = vmatpush1.msra.mxu0 %v2144
      %2150 = vmatprep.subr.mxu0 0.0
      %2151 = vmatpush1.msra.mxu0 0.0
      %2152 = vmatprep.subr.mxu0 0.0
      %2153 = vmatpush1.msra.mxu0 0.0
      %2154 = vmatprep.subr.mxu0 0.0
      %2155 = vmatpush1.msra.mxu0 0.0
      %2156 = vmatprep.subr.mxu0 0.0
      %2157 = vmatpush1.msra.mxu0 0.0
      %2158 = vmatprep.subr.mxu0 0.0
      %2159 = vmatpush1.msra.mxu0 0.0
      %2160 = vmatprep.subr.mxu0 0.0
      %2161 = vmatpush1.msra.mxu0 0.0
      %2162 = vmatprep.subr.mxu0 0.0
      %2163 = vmatpush1.msra.mxu0 0.0
      %2164 = vmatprep.subr.mxu0 0.0
      %2165 = vmatpush1.msra.mxu0 0.0
      %2166 = vmatprep.subr.mxu0 0.0
      %2167 = vmatpush1.msra.mxu0 0.0
      %2168 = vmatprep.subr.mxu0 0.0
      %2169 = vmatpush1.msra.mxu0 0.0
      %2170 = vmatprep.subr.mxu0 0.0
      %2171 = vmatpush1.msra.mxu0 0.0
      %2172 = vmatprep.subr.mxu0 0.0
      %2173 = vmatpush1.msra.mxu0 0.0
      %2174 = vmatprep.subr.mxu0 0.0
      %2175 = vmatpush1.msra.mxu0 0.0
      %2176 = vmatprep.subr.mxu0 0.0
      %2177 = vmatpush1.msra.mxu0 0.0
      %2178 = vmatprep.subr.mxu0 0.0
      %2179 = vmatpush1.msra.mxu0 0.0
      %2180 = vmatprep.subr.mxu0 0.0
      %2181 = vmatpush1.msra.mxu0 0.0
      %2182 = vmatprep.subr.mxu0 0.0
      %2183 = vmatpush1.msra.mxu0 0.0
      %2184 = vmatprep.subr.mxu0 0.0
      %2185 = vmatpush1.msra.mxu0 0.0
      %2186 = vmatprep.subr.mxu0 0.0
      %2187 = vmatpush1.msra.mxu0 0.0
      %2188 = vmatprep.subr.mxu0 0.0
      %2189 = vmatpush1.msra.mxu0 0.0
      %2190 = vmatprep.subr.mxu0 0.0
      %2191 = vmatpush1.msra.mxu0 0.0
      %2192 = vmatprep.subr.mxu0 0.0
      %2193 = vmatpush1.msra.mxu0 0.0
      %2194 = vmatprep.subr.mxu0 0.0
      %2195 = vmatpush1.msra.mxu0 0.0
      %2196 = vmatprep.subr.mxu0 0.0
      %2197 = vmatpush1.msra.mxu0 0.0
      %2198 = vmatprep.subr.mxu0 0.0
      %2199 = vmatpush1.msra.mxu0 0.0
      %2200 = vmatprep.subr.mxu0 0.0
      %2201 = vmatpush1.msra.mxu0 0.0
      %2202 = vmatprep.subr.mxu0 0.0
      %2203 = vmatpush1.msra.mxu0 0.0
      %2204 = vmatprep.subr.mxu0 0.0
      %2205 = vmatpush1.msra.mxu0 0.0
      %2206 = vmatprep.subr.mxu0 0.0
      %2207 = vmatpush1.msra.mxu0 0.0
      %2208 = vmatprep.subr.mxu0 0.0
      %2209 = vmatpush1.msra.mxu0 0.0
      %2210 = vmatprep.mubr.f32.mxu0 0.0
      %2211 = vmatmul.mubr.f32.gmra.mrb[0].mxu0 %v2120
      %v2212 = vpop.f32.mrb[0].mxu0
      %v2213 = vadd.f32 %v2118, %v2212
      %v2214 = vpop.f32.mrb[0].mxu0
      %2215 = vmatprep.mubr.f32.mxu0 0.0
      %2216 = vmatmul.mubr.f32.gmra.mrb[0].mxu0 %v2123
      %v2217 = vpop.f32.mrb[0].mxu0
      %v2218 = vadd.f32 %v2118, %v2217
      %v2219 = vpop.f32.mrb[0].mxu0
      %2220 = vmatprep.mubr.f32.mxu0 0.0
      %2221 = vmatmul.mubr.f32.gmra.mrb[0].mxu0 %v2126
      %v2222 = vpop.f32.mrb[0].mxu0
      %v2223 = vadd.f32 %v2118, %v2222
      %v2224 = vpop.f32.mrb[0].mxu0
      %2225 = vmatprep.mubr.f32.mxu0 0.0
      %2226 = vmatmul.mubr.f32.gmra.mrb[0].mxu0 %v2129
      %v2227 = vpop.f32.mrb[0].mxu0
      %v2228 = vadd.f32 %v2118, %v2227
      %v2229 = vpop.f32.mrb[0].mxu0
      %2230 = vmatprep.mubr.f32.mxu0 0.0
      %2231 = vmatmul.mubr.f32.gmra.mrb[0].mxu0 %v2132
      %v2232 = vpop.f32.mrb[0].mxu0
      %v2233 = vadd.f32 %v2118, %v2232
      %v2234 = vpop.f32.mrb[0].mxu0
      %2235 = vmatprep.mubr.f32.mxu0 0.0
      %2236 = vmatmul.mubr.f32.gmra.mrb[0].mxu0 %v2135
      %v2237 = vpop.f32.mrb[0].mxu0
      %v2238 = vadd.f32 %v2118, %v2237
      %v2239 = vpop.f32.mrb[0].mxu0
      %2240 = vmatprep.mubr.f32.mxu0 0.0
      %2241 = vmatmul.mubr.f32.gmra.mrb[0].mxu0 %v2138
      %v2242 = vpop.f32.mrb[0].mxu0
      %v2243 = vadd.f32 %v2118, %v2242
      %v2244 = vpop.f32.mrb[0].mxu0
      %2245 = vmatprep.mubr.f32.mxu0 0.0
      %2246 = vmatmul.mubr.f32.gmra.mrb[0].mxu0 %v2141
      %v2247 = vpop.f32.mrb[0].mxu0
      %v2248 = vadd.f32 %v2118, %v2247
      %v2249 = vpop.f32.mrb[0].mxu0
      %2250 = vdwg.mxu0
      %v2251 = vadd.f32 %v2213, %v2030
      %v2252 = vadd.f32 %v2218, %v2031
      %v2253 = vadd.f32 %v2223, %v2032
      %v2254 = vadd.f32 %v2228, %v2033
      %v2255 = vadd.f32 %v2233, %v2034
      %v2256 = vadd.f32 %v2238, %v2035
      %v2257 = vadd.f32 %v2243, %v2036
      %v2258 = vadd.f32 %v2248, %v2037
      %v2259 = vxor.u32 %v2213, 2147483648
      %v2260 = vxor.u32 %v2218, 2147483648
      %v2261 = vxor.u32 %v2223, 2147483648
      %v2262 = vxor.u32 %v2228, 2147483648
      %v2263 = vxor.u32 %v2233, 2147483648
      %v2264 = vxor.u32 %v2238, 2147483648
      %v2265 = vxor.u32 %v2243, 2147483648
      %v2266 = vxor.u32 %v2248, 2147483648
      %v2267 = vmul.f32 %v2259, 1.442695
      %v2268 = vpow.pop %v2267
      %v2269 = vmul.f32 %v2260, 1.442695
      %v2270 = vpow.pop %v2269
      %v2271 = vmul.f32 %v2261, 1.442695
      %v2272 = vpow.pop %v2271
      %v2273 = vmul.f32 %v2262, 1.442695
      %v2274 = vpow.pop %v2273
      %v2275 = vmul.f32 %v2263, 1.442695
      %v2276 = vpow.pop %v2275
      %v2277 = vmul.f32 %v2264, 1.442695
      %v2278 = vpow.pop %v2277
      %v2279 = vmul.f32 %v2265, 1.442695
      %v2280 = vpow.pop %v2279
      %v2281 = vmul.f32 %v2266, 1.442695
      %v2282 = vpow.pop %v2281
      %v2283 = vadd.f32 %v2268, 1.0
      %v2284 = vadd.f32 %v2270, 1.0
      %v2285 = vadd.f32 %v2272, 1.0
      %v2286 = vadd.f32 %v2274, 1.0
      %v2287 = vadd.f32 %v2276, 1.0
      %v2288 = vadd.f32 %v2278, 1.0
      %v2289 = vadd.f32 %v2280, 1.0
      %v2290 = vadd.f32 %v2282, 1.0
      %v2291 = vrcp.pop %v2283
      %v2292 = vmul.f32 1.0, %v2291
      %v2293 = vrcp.pop %v2284
      %v2294 = vmul.f32 1.0, %v2293
      %v2295 = vrcp.pop %v2285
      %v2296 = vmul.f32 1.0, %v2295
      %v2297 = vrcp.pop %v2286
      %v2298 = vmul.f32 1.0, %v2297
      %v2299 = vrcp.pop %v2287
      %v2300 = vmul.f32 1.0, %v2299
      %v2301 = vrcp.pop %v2288
      %v2302 = vmul.f32 1.0, %v2301
      %v2303 = vrcp.pop %v2289
      %v2304 = vmul.f32 1.0, %v2303
      %v2305 = vrcp.pop %v2290
      %v2306 = vmul.f32 1.0, %v2305
      %2315 = vrot.lane.b32.xlu0 %v2292, 120
      %v2316 = vpop.permute.xlu0 %2315
      %2317 = vrot.lane.b32.xlu0 %v2294, 120
      %v2318 = vpop.permute.xlu0 %2317
      %2319 = vrot.lane.b32.xlu0 %v2296, 120
      %v2320 = vpop.permute.xlu0 %2319
      %2321 = vrot.lane.b32.xlu0 %v2298, 120
      %v2322 = vpop.permute.xlu0 %2321
      %2323 = vrot.lane.b32.xlu0 %v2300, 120
      %v2324 = vpop.permute.xlu0 %2323
      %2325 = vrot.lane.b32.xlu0 %v2302, 120
      %v2326 = vpop.permute.xlu0 %2325
      %2327 = vrot.lane.b32.xlu0 %v2304, 120
      %v2328 = vpop.permute.xlu0 %2327
      %2329 = vrot.lane.b32.xlu0 %v2306, 120
      %v2330 = vpop.permute.xlu0 %2329
      %v2339 = vmul.f32 %v2251, %v2316
      %v2340 = vmul.f32 %v2252, %v2318
      %v2341 = vmul.f32 %v2253, %v2320
      %v2342 = vmul.f32 %v2254, %v2322
      %v2343 = vmul.f32 %v2255, %v2324
      %v2344 = vmul.f32 %v2256, %v2326
      %v2345 = vmul.f32 %v2257, %v2328
      %v2346 = vmul.f32 %v2258, %v2330
      %v2347 = vsel %vm273, %v2339, 0.0
      %2348 = vadd.xlane.f32.xlu0 %v2347
      %v2349 = vpop.xlane.xlu0 %2348
      %v2350 = vsel %vm273, %v2340, 0.0
      %2351 = vadd.xlane.f32.xlu0 %v2350
      %v2352 = vpop.xlane.xlu0 %2351
      %v2353 = vsel %vm273, %v2341, 0.0
      %2354 = vadd.xlane.f32.xlu0 %v2353
      %v2355 = vpop.xlane.xlu0 %2354
      %v2356 = vsel %vm273, %v2342, 0.0
      %2357 = vadd.xlane.f32.xlu0 %v2356
      %v2358 = vpop.xlane.xlu0 %2357
      %v2359 = vsel %vm273, %v2343, 0.0
      %2360 = vadd.xlane.f32.xlu0 %v2359
      %v2361 = vpop.xlane.xlu0 %2360
      %v2362 = vsel %vm273, %v2344, 0.0
      %2363 = vadd.xlane.f32.xlu0 %v2362
      %v2364 = vpop.xlane.xlu0 %2363
      %v2365 = vsel %vm273, %v2345, 0.0
      %2366 = vadd.xlane.f32.xlu0 %v2365
      %v2367 = vpop.xlane.xlu0 %2366
      %v2368 = vsel %vm273, %v2346, 0.0
      %2369 = vadd.xlane.f32.xlu0 %v2368
      %v2370 = vpop.xlane.xlu0 %2369
      %v2371 = vadd.f32 %v2349, %v2352
      %v2372 = vrot.slane %v2371, 4
      %v2373 = vadd.f32 %v2371, %v2372
      %v2374 = vrot.slane %v2373, 2
      %v2375 = vadd.f32 %v2373, %v2374
      %v2376 = vrot.slane %v2375, 1
      %v2377 = vadd.f32 %v2375, %v2376
      %v2378 = vadd.f32 %v2355, %v2358
      %v2379 = vrot.slane %v2378, 4
      %v2380 = vadd.f32 %v2378, %v2379
      %v2381 = vrot.slane %v2380, 2
      %v2382 = vadd.f32 %v2380, %v2381
      %v2383 = vrot.slane %v2382, 1
      %v2384 = vadd.f32 %v2382, %v2383
      %v2385 = vadd.f32 %v2361, %v2364
      %v2386 = vrot.slane %v2385, 4
      %v2387 = vadd.f32 %v2385, %v2386
      %v2388 = vrot.slane %v2387, 2
      %v2389 = vadd.f32 %v2387, %v2388
      %v2390 = vrot.slane %v2389, 1
      %v2391 = vadd.f32 %v2389, %v2390
      %v2392 = vadd.f32 %v2367, %v2370
      %v2393 = vrot.slane %v2392, 4
      %v2394 = vadd.f32 %v2392, %v2393
      %v2395 = vrot.slane %v2394, 2
      %v2396 = vadd.f32 %v2394, %v2395
      %v2397 = vrot.slane %v2396, 1
      %v2398 = vadd.f32 %v2396, %v2397
      %v2399 = vmul.f32 %v2377, 0.0078125
      %v2400 = vmul.f32 %v2384, 0.0078125
      %v2401 = vmul.f32 %v2391, 0.0078125
      %v2402 = vmul.f32 %v2398, 0.0078125
      %v2403 = vsub.f32 %v2339, %v2399
      %v2404 = vsub.f32 %v2340, %v2399
      %v2405 = vsub.f32 %v2341, %v2400
      %v2406 = vsub.f32 %v2342, %v2400
      %v2407 = vsub.f32 %v2343, %v2401
      %v2408 = vsub.f32 %v2344, %v2401
      %v2409 = vsub.f32 %v2345, %v2402
      %v2410 = vsub.f32 %v2346, %v2402
      %v2411 = vmul.f32 %v2403, %v2403
      %v2412 = vmul.f32 %v2404, %v2404
      %v2413 = vmul.f32 %v2405, %v2405
      %v2414 = vmul.f32 %v2406, %v2406
      %v2415 = vmul.f32 %v2407, %v2407
      %v2416 = vmul.f32 %v2408, %v2408
      %v2417 = vmul.f32 %v2409, %v2409
      %v2418 = vmul.f32 %v2410, %v2410
      %v2419 = vsel %vm273, %v2411, 0.0
      %2420 = vadd.xlane.f32.xlu0 %v2419
      %v2421 = vpop.xlane.xlu0 %2420
      %v2422 = vsel %vm273, %v2412, 0.0
      %2423 = vadd.xlane.f32.xlu0 %v2422
      %v2424 = vpop.xlane.xlu0 %2423
      %v2425 = vsel %vm273, %v2413, 0.0
      %2426 = vadd.xlane.f32.xlu0 %v2425
      %v2427 = vpop.xlane.xlu0 %2426
      %v2428 = vsel %vm273, %v2414, 0.0
      %2429 = vadd.xlane.f32.xlu0 %v2428
      %v2430 = vpop.xlane.xlu0 %2429
      %v2431 = vsel %vm273, %v2415, 0.0
      %2432 = vadd.xlane.f32.xlu0 %v2431
      %v2433 = vpop.xlane.xlu0 %2432
      %v2434 = vsel %vm273, %v2416, 0.0
      %2435 = vadd.xlane.f32.xlu0 %v2434
      %v2436 = vpop.xlane.xlu0 %2435
      %v2437 = vsel %vm273, %v2417, 0.0
      %2438 = vadd.xlane.f32.xlu0 %v2437
      %v2439 = vpop.xlane.xlu0 %2438
      %v2440 = vsel %vm273, %v2418, 0.0
      %2441 = vadd.xlane.f32.xlu0 %v2440
      %v2442 = vpop.xlane.xlu0 %2441
      %v2443 = vadd.f32 %v2421, %v2424
      %v2444 = vrot.slane %v2443, 4
      %v2445 = vadd.f32 %v2443, %v2444
      %v2446 = vrot.slane %v2445, 2
      %v2447 = vadd.f32 %v2445, %v2446
      %v2448 = vrot.slane %v2447, 1
      %v2449 = vadd.f32 %v2447, %v2448
      %v2450 = vadd.f32 %v2427, %v2430
      %v2451 = vrot.slane %v2450, 4
      %v2452 = vadd.f32 %v2450, %v2451
      %v2453 = vrot.slane %v2452, 2
      %v2454 = vadd.f32 %v2452, %v2453
      %v2455 = vrot.slane %v2454, 1
      %v2456 = vadd.f32 %v2454, %v2455
      %v2457 = vadd.f32 %v2433, %v2436
      %v2458 = vrot.slane %v2457, 4
      %v2459 = vadd.f32 %v2457, %v2458
      %v2460 = vrot.slane %v2459, 2
      %v2461 = vadd.f32 %v2459, %v2460
      %v2462 = vrot.slane %v2461, 1
      %v2463 = vadd.f32 %v2461, %v2462
      %v2464 = vadd.f32 %v2439, %v2442
      %v2465 = vrot.slane %v2464, 4
      %v2466 = vadd.f32 %v2464, %v2465
      %v2467 = vrot.slane %v2466, 2
      %v2468 = vadd.f32 %v2466, %v2467
      %v2469 = vrot.slane %v2468, 1
      %v2470 = vadd.f32 %v2468, %v2469
      %v2471 = vmul.f32 %v2449, 0.0078125
      %v2472 = vmul.f32 %v2456, 0.0078125
      %v2473 = vmul.f32 %v2463, 0.0078125
      %v2474 = vmul.f32 %v2470, 0.0078125
      %v2475 = vadd.f32 %v2471, 1e-05
      %v2476 = vadd.f32 %v2472, 1e-05
      %v2477 = vadd.f32 %v2473, 1e-05
      %v2478 = vadd.f32 %v2474, 1e-05
      %v2479 = vrsqrt.pop %v2475
      %v2480 = vrsqrt.pop %v2476
      %v2481 = vrsqrt.pop %v2477
      %v2482 = vrsqrt.pop %v2478
      %v2483 = vmul.f32 %v2403, %v2479
      %v2484 = vmul.f32 %v2404, %v2479
      %v2485 = vmul.f32 %v2405, %v2480
      %v2486 = vmul.f32 %v2406, %v2480
      %v2487 = vmul.f32 %v2407, %v2481
      %v2488 = vmul.f32 %v2408, %v2481
      %v2489 = vmul.f32 %v2409, %v2482
      %v2490 = vmul.f32 %v2410, %v2482
      %v2491 = vld [vmem:[%s2 + $0x60] sm:$0xff]
      %v2492 = vld [vmem:[%s2 + $0x68] sm:$0xff]
      %v2493 = vmul.f32 %v2483, %v2491
      %v2494 = vmul.f32 %v2484, %v2492
      %v2495 = vmul.f32 %v2485, %v2491
      %v2496 = vmul.f32 %v2486, %v2492
      %v2497 = vmul.f32 %v2487, %v2491
      %v2498 = vmul.f32 %v2488, %v2492
      %v2499 = vmul.f32 %v2489, %v2491
      %v2500 = vmul.f32 %v2490, %v2492
      %v2501 = vld [vmem:[%s2 + $0x70] sm:$0xff]
      %v2502 = vld [vmem:[%s2 + $0x78] sm:$0xff]
      %v2503 = vadd.f32 %v2493, %v2501
      %v2504 = vadd.f32 %v2494, %v2502
      %v2505 = vadd.f32 %v2495, %v2501
      %v2506 = vadd.f32 %v2496, %v2502
      %v2507 = vadd.f32 %v2497, %v2501
      %v2508 = vadd.f32 %v2498, %v2502
      %v2509 = vadd.f32 %v2499, %v2501
      %v2510 = vadd.f32 %v2500, %v2502
      %v2511 = vsel %vm273, %v2509, 0.0
      %v2512 = vsel %vm273, %v2510, 0.0
      %2515 = vrot.lane.b32.xlu0 %v2505, 8
      %v2516 = vpop.permute.xlu0 %2515
      %2517 = vrot.lane.b32.xlu0 %v2506, 8
      %v2518 = vpop.permute.xlu0 %2517
      %2523 = vrot.lane.b32.xlu0 %v2507, 16
      %v2524 = vpop.permute.xlu0 %2523
      %2525 = vrot.lane.b32.xlu0 %v2508, 16
      %v2526 = vpop.permute.xlu0 %2525
      %2531 = vrot.lane.b32.xlu0 %v2509, 24
      %v2532 = vpop.permute.xlu0 %2531
      %2533 = vrot.lane.b32.xlu0 %v2510, 24
      %v2534 = vpop.permute.xlu0 %2533
      %v2537 = vsel %vm273, %v2503, %v2516
      %v2538 = vsel %vm273, %v2504, %v2518
      %v2539 = vsel %vm286, %v2537, %v2524
      %v2540 = vsel %vm286, %v2538, %v2526
      %v2541 = vsel %vm307, %v2539, %v2532
      %v2542 = vsel %vm307, %v2540, %v2534
      %v2543 = vld [vmem:[%s2 + $0x80] sm:$0xff]
      %v2544 = vld [vmem:[%s2 + $0x88] sm:$0xff]
      %v2545 = vld [vmem:[%s2 + $0x90] sm:$0xff]
      %v2546 = vld [vmem:[%s2 + $0x98] sm:$0xff]
      %v2547 = vld [vmem:[%s2 + $0xa0] sm:$0x1]
      %v2548 = vlaneseq
      %v2549 = vshrl.u32 %v2548, 7
      %v2550 = vsub.s32 0, %v2549
      %v2551 = vrot.slane %v2547, %v2550
      %vm2552 = vcmask 261120
      %v2554 = vsel %vm2552, %v2541, 0
      %v2557 = vsel %vm2552, %v2542, 0
      %2559 = vmatprep.subr.mxu0 0.0
      %2560 = vmatpush1.msra.mxu0 %v2543
      %2561 = vmatprep.subr.mxu0 0.0
      %2562 = vmatpush1.msra.mxu0 %v2544
      %2563 = vmatprep.subr.mxu0 0.0
      %2564 = vmatpush1.msra.mxu0 %v2545
      %2565 = vmatprep.subr.mxu0 0.0
      %2566 = vmatpush1.msra.mxu0 %v2546
      %2567 = vmatprep.subr.mxu0 0.0
      %2568 = vmatpush1.msra.mxu0 0.0
      %2569 = vmatprep.subr.mxu0 0.0
      %2570 = vmatpush1.msra.mxu0 0.0
      %2571 = vmatprep.subr.mxu0 0.0
      %2572 = vmatpush1.msra.mxu0 0.0
      %2573 = vmatprep.subr.mxu0 0.0
      %2574 = vmatpush1.msra.mxu0 0.0
      %2575 = vmatprep.subr.mxu0 0.0
      %2576 = vmatpush1.msra.mxu0 0.0
      %2577 = vmatprep.subr.mxu0 0.0
      %2578 = vmatpush1.msra.mxu0 0.0
      %2579 = vmatprep.subr.mxu0 0.0
      %2580 = vmatpush1.msra.mxu0 0.0
      %2581 = vmatprep.subr.mxu0 0.0
      %2582 = vmatpush1.msra.mxu0 0.0
      %2583 = vmatprep.subr.mxu0 0.0
      %2584 = vmatpush1.msra.mxu0 0.0
      %2585 = vmatprep.subr.mxu0 0.0
      %2586 = vmatpush1.msra.mxu0 0.0
      %2587 = vmatprep.subr.mxu0 0.0
      %2588 = vmatpush1.msra.mxu0 0.0
      %2589 = vmatprep.subr.mxu0 0.0
      %2590 = vmatpush1.msra.mxu0 0.0
      %2591 = vmatprep.subr.mxu0 0.0
      %2592 = vmatpush1.msra.mxu0 0.0
      %2593 = vmatprep.subr.mxu0 0.0
      %2594 = vmatpush1.msra.mxu0 0.0
      %2595 = vmatprep.subr.mxu0 0.0
      %2596 = vmatpush1.msra.mxu0 0.0
      %2597 = vmatprep.subr.mxu0 0.0
      %2598 = vmatpush1.msra.mxu0 0.0
      %2599 = vmatprep.subr.mxu0 0.0
      %2600 = vmatpush1.msra.mxu0 0.0
      %2601 = vmatprep.subr.mxu0 0.0
      %2602 = vmatpush1.msra.mxu0 0.0
      %2603 = vmatprep.subr.mxu0 0.0
      %2604 = vmatpush1.msra.mxu0 0.0
      %2605 = vmatprep.subr.mxu0 0.0
      %2606 = vmatpush1.msra.mxu0 0.0
      %2607 = vmatprep.subr.mxu0 0.0
      %2608 = vmatpush1.msra.mxu0 0.0
      %2609 = vmatprep.subr.mxu0 0.0
      %2610 = vmatpush1.msra.mxu0 0.0
      %2611 = vmatprep.subr.mxu0 0.0
      %2612 = vmatpush1.msra.mxu0 0.0
      %2613 = vmatprep.subr.mxu0 0.0
      %2614 = vmatpush1.msra.mxu0 0.0
      %2615 = vmatprep.subr.mxu0 0.0
      %2616 = vmatpush1.msra.mxu0 0.0
      %2617 = vmatprep.subr.mxu0 0.0
      %2618 = vmatpush1.msra.mxu0 0.0
      %2619 = vmatprep.subr.mxu0 0.0
      %2620 = vmatpush1.msra.mxu0 0.0
      %2621 = vmatprep.subr.mxu0 0.0
      %2622 = vmatpush1.msra.mxu0 0.0
      %2623 = vmatprep.mubr.f32.mxu0 0.0
      %2624 = vmatmul.mubr.f32.gmra.mrb[0].mxu0 %v2554
      %v2625 = vpop.f32.mrb[0].mxu0
      %v2626 = vadd.f32 %v2551, %v2625
      %v2627 = vpop.f32.mrb[0].mxu0
      %2628 = vmatprep.mubr.f32.mxu0 0.0
      %2629 = vmatmul.mubr.f32.gmra.mrb[0].mxu0 %v2557
      %v2630 = vpop.f32.mrb[0].mxu0
      %v2631 = vadd.f32 %v2551, %v2630
      %v2632 = vpop.f32.mrb[0].mxu0
      %2633 = vdwg.mxu0
      %v2634 = vadd.f32 %v2626, %v2511
      %v2635 = vadd.f32 %v2631, %v2512
      %v2636 = vxor.u32 %v2626, 2147483648
      %v2637 = vxor.u32 %v2631, 2147483648
      %v2638 = vmul.f32 %v2636, 1.442695
      %v2639 = vpow.pop %v2638
      %v2640 = vmul.f32 %v2637, 1.442695
      %v2641 = vpow.pop %v2640
      %v2642 = vadd.f32 %v2639, 1.0
      %v2643 = vadd.f32 %v2641, 1.0
      %v2644 = vrcp.pop %v2642
      %v2645 = vmul.f32 1.0, %v2644
      %v2646 = vrcp.pop %v2643
      %v2647 = vmul.f32 1.0, %v2646
      %2650 = vrot.lane.b32.xlu0 %v2645, 112
      %v2651 = vpop.permute.xlu0 %2650
      %2652 = vrot.lane.b32.xlu0 %v2647, 112
      %v2653 = vpop.permute.xlu0 %2652
      %v2656 = vmul.f32 %v2634, %v2651
      %v2657 = vmul.f32 %v2635, %v2653
      %v2658 = vsel %vm286, %v2656, 0.0
      %2659 = vadd.xlane.f32.xlu0 %v2658
      %v2660 = vpop.xlane.xlu0 %2659
      %v2661 = vsel %vm286, %v2657, 0.0
      %2662 = vadd.xlane.f32.xlu0 %v2661
      %v2663 = vpop.xlane.xlu0 %2662
      %v2664 = vadd.f32 %v2660, %v2663
      %v2665 = vrot.slane %v2664, 4
      %v2666 = vadd.f32 %v2664, %v2665
      %v2667 = vrot.slane %v2666, 2
      %v2668 = vadd.f32 %v2666, %v2667
      %v2669 = vrot.slane %v2668, 1
      %v2670 = vadd.f32 %v2668, %v2669
      %v2671 = vmul.f32 %v2670, 0.00390625
      %v2672 = vsub.f32 %v2656, %v2671
      %v2673 = vsub.f32 %v2657, %v2671
      %v2674 = vmul.f32 %v2672, %v2672
      %v2675 = vmul.f32 %v2673, %v2673
      %v2676 = vsel %vm286, %v2674, 0.0
      %2677 = vadd.xlane.f32.xlu0 %v2676
      %v2678 = vpop.xlane.xlu0 %2677
      %v2679 = vsel %vm286, %v2675, 0.0
      %2680 = vadd.xlane.f32.xlu0 %v2679
      %v2681 = vpop.xlane.xlu0 %2680
      %v2682 = vadd.f32 %v2678, %v2681
      %v2683 = vrot.slane %v2682, 4
      %v2684 = vadd.f32 %v2682, %v2683
      %v2685 = vrot.slane %v2684, 2
      %v2686 = vadd.f32 %v2684, %v2685
      %v2687 = vrot.slane %v2686, 1
      %v2688 = vadd.f32 %v2686, %v2687
      %v2689 = vmul.f32 %v2688, 0.00390625
      %v2690 = vadd.f32 %v2689, 1e-05
      %v2691 = vrsqrt.pop %v2690
      %v2692 = vmul.f32 %v2672, %v2691
      %v2693 = vmul.f32 %v2673, %v2691
      %v2694 = vld [vmem:[%s2 + $0xa8] sm:$0xff]
      %v2695 = vld [vmem:[%s2 + $0xb0] sm:$0xff]
      %v2696 = vmul.f32 %v2692, %v2694
      %v2697 = vmul.f32 %v2693, %v2695
      %v2698 = vld [vmem:[%s2 + $0xb8] sm:$0xff]
      %v2699 = vld [vmem:[%s2 + $0xc0] sm:$0xff]
      %v2700 = vadd.f32 %v2696, %v2698
      %v2701 = vadd.f32 %v2697, %v2699
      %v2702 = vld [vmem:[%s2 + $0xc8] sm:$0xff]
      %v2703 = vld [vmem:[%s2 + $0xd0] sm:$0xff]
      %v2704 = vld [vmem:[%s2 + $0xd8] sm:$0x1]
      %v2705 = vlaneseq
      %v2706 = vshrl.u32 %v2705, 7
      %v2707 = vsub.s32 0, %v2706
      %v2708 = vrot.slane %v2704, %v2707
      %v2710 = vsel %vm286, %v2700, 0
      %v2713 = vsel %vm286, %v2701, 0
      %2715 = vmatprep.subr.mxu0 0.0
      %2716 = vmatpush1.msra.mxu0 %v2702
      %2717 = vmatprep.subr.mxu0 0.0
      %2718 = vmatpush1.msra.mxu0 %v2703
      %2719 = vmatprep.subr.mxu0 0.0
      %2720 = vmatpush1.msra.mxu0 0.0
      %2721 = vmatprep.subr.mxu0 0.0
      %2722 = vmatpush1.msra.mxu0 0.0
      %2723 = vmatprep.subr.mxu0 0.0
      %2724 = vmatpush1.msra.mxu0 0.0
      %2725 = vmatprep.subr.mxu0 0.0
      %2726 = vmatpush1.msra.mxu0 0.0
      %2727 = vmatprep.subr.mxu0 0.0
      %2728 = vmatpush1.msra.mxu0 0.0
      %2729 = vmatprep.subr.mxu0 0.0
      %2730 = vmatpush1.msra.mxu0 0.0
      %2731 = vmatprep.subr.mxu0 0.0
      %2732 = vmatpush1.msra.mxu0 0.0
      %2733 = vmatprep.subr.mxu0 0.0
      %2734 = vmatpush1.msra.mxu0 0.0
      %2735 = vmatprep.subr.mxu0 0.0
      %2736 = vmatpush1.msra.mxu0 0.0
      %2737 = vmatprep.subr.mxu0 0.0
      %2738 = vmatpush1.msra.mxu0 0.0
      %2739 = vmatprep.subr.mxu0 0.0
      %2740 = vmatpush1.msra.mxu0 0.0
      %2741 = vmatprep.subr.mxu0 0.0
      %2742 = vmatpush1.msra.mxu0 0.0
      %2743 = vmatprep.subr.mxu0 0.0
      %2744 = vmatpush1.msra.mxu0 0.0
      %2745 = vmatprep.subr.mxu0 0.0
      %2746 = vmatpush1.msra.mxu0 0.0
      %2747 = vmatprep.subr.mxu0 0.0
      %2748 = vmatpush1.msra.mxu0 0.0
      %2749 = vmatprep.subr.mxu0 0.0
      %2750 = vmatpush1.msra.mxu0 0.0
      %2751 = vmatprep.subr.mxu0 0.0
      %2752 = vmatpush1.msra.mxu0 0.0
      %2753 = vmatprep.subr.mxu0 0.0
      %2754 = vmatpush1.msra.mxu0 0.0
      %2755 = vmatprep.subr.mxu0 0.0
      %2756 = vmatpush1.msra.mxu0 0.0
      %2757 = vmatprep.subr.mxu0 0.0
      %2758 = vmatpush1.msra.mxu0 0.0
      %2759 = vmatprep.subr.mxu0 0.0
      %2760 = vmatpush1.msra.mxu0 0.0
      %2761 = vmatprep.subr.mxu0 0.0
      %2762 = vmatpush1.msra.mxu0 0.0
      %2763 = vmatprep.subr.mxu0 0.0
      %2764 = vmatpush1.msra.mxu0 0.0
      %2765 = vmatprep.subr.mxu0 0.0
      %2766 = vmatpush1.msra.mxu0 0.0
      %2767 = vmatprep.subr.mxu0 0.0
      %2768 = vmatpush1.msra.mxu0 0.0
      %2769 = vmatprep.subr.mxu0 0.0
      %2770 = vmatpush1.msra.mxu0 0.0
      %2771 = vmatprep.subr.mxu0 0.0
      %2772 = vmatpush1.msra.mxu0 0.0
      %2773 = vmatprep.subr.mxu0 0.0
      %2774 = vmatpush1.msra.mxu0 0.0
      %2775 = vmatprep.subr.mxu0 0.0
      %2776 = vmatpush1.msra.mxu0 0.0
      %2777 = vmatprep.subr.mxu0 0.0
      %2778 = vmatpush1.msra.mxu0 0.0
      %2779 = vmatprep.mubr.f32.mxu0 0.0
      %2780 = vmatmul.mubr.f32.gmra.mrb[0].mxu0 %v2710
      %v2781 = vpop.f32.mrb[0].mxu0
      %v2782 = vadd.f32 %v2708, %v2781
      %v2783 = vpop.f32.mrb[0].mxu0
      %2784 = vmatprep.mubr.f32.mxu0 0.0
      %2785 = vmatmul.mubr.f32.gmra.mrb[0].mxu0 %v2713
      %v2786 = vpop.f32.mrb[0].mxu0
      %v2787 = vadd.f32 %v2708, %v2786
      %v2788 = vpop.f32.mrb[0].mxu0
      %2789 = vdwg.mxu0
      %v2790 = vmax.f32 %v2782, 0.0
      %v2791 = vmax.f32 %v2787, 0.0
      %v2792 = vld [vmem:[%s2 + $0xe0] sm:$0xff]
      %v2793 = vld [vmem:[%s2 + $0xe8] sm:$0xff]
      %v2794 = vld [vmem:[%s2 + $0xf0] sm:$0x1]
      %v2795 = vlaneseq
      %v2796 = vshrl.u32 %v2795, 7
      %v2797 = vsub.s32 0, %v2796
      %v2798 = vrot.slane %v2794, %v2797
      %v2800 = vsel %vm286, %v2790, 0
      %v2803 = vsel %vm286, %v2791, 0
      %2805 = vmatprep.subr.mxu0 0.0
      %2806 = vmatpush1.msra.mxu0 %v2792
      %2807 = vmatprep.subr.mxu0 0.0
      %2808 = vmatpush1.msra.mxu0 %v2793
      %2809 = vmatprep.subr.mxu0 0.0
      %2810 = vmatpush1.msra.mxu0 0.0
      %2811 = vmatprep.subr.mxu0 0.0
      %2812 = vmatpush1.msra.mxu0 0.0
      %2813 = vmatprep.subr.mxu0 0.0
      %2814 = vmatpush1.msra.mxu0 0.0
      %2815 = vmatprep.subr.mxu0 0.0
      %2816 = vmatpush1.msra.mxu0 0.0
      %2817 = vmatprep.subr.mxu0 0.0
      %2818 = vmatpush1.msra.mxu0 0.0
      %2819 = vmatprep.subr.mxu0 0.0
      %2820 = vmatpush1.msra.mxu0 0.0
      %2821 = vmatprep.subr.mxu0 0.0
      %2822 = vmatpush1.msra.mxu0 0.0
      %2823 = vmatprep.subr.mxu0 0.0
      %2824 = vmatpush1.msra.mxu0 0.0
      %2825 = vmatprep.subr.mxu0 0.0
      %2826 = vmatpush1.msra.mxu0 0.0
      %2827 = vmatprep.subr.mxu0 0.0
      %2828 = vmatpush1.msra.mxu0 0.0
      %2829 = vmatprep.subr.mxu0 0.0
      %2830 = vmatpush1.msra.mxu0 0.0
      %2831 = vmatprep.subr.mxu0 0.0
      %2832 = vmatpush1.msra.mxu0 0.0
      %2833 = vmatprep.subr.mxu0 0.0
      %2834 = vmatpush1.msra.mxu0 0.0
      %2835 = vmatprep.subr.mxu0 0.0
      %2836 = vmatpush1.msra.mxu0 0.0
      %2837 = vmatprep.subr.mxu0 0.0
      %2838 = vmatpush1.msra.mxu0 0.0
      %2839 = vmatprep.subr.mxu0 0.0
      %2840 = vmatpush1.msra.mxu0 0.0
      %2841 = vmatprep.subr.mxu0 0.0
      %2842 = vmatpush1.msra.mxu0 0.0
      %2843 = vmatprep.subr.mxu0 0.0
      %2844 = vmatpush1.msra.mxu0 0.0
      %2845 = vmatprep.subr.mxu0 0.0
      %2846 = vmatpush1.msra.mxu0 0.0
      %2847 = vmatprep.subr.mxu0 0.0
      %2848 = vmatpush1.msra.mxu0 0.0
      %2849 = vmatprep.subr.mxu0 0.0
      %2850 = vmatpush1.msra.mxu0 0.0
      %2851 = vmatprep.subr.mxu0 0.0
      %2852 = vmatpush1.msra.mxu0 0.0
      %2853 = vmatprep.subr.mxu0 0.0
      %2854 = vmatpush1.msra.mxu0 0.0
      %2855 = vmatprep.subr.mxu0 0.0
      %2856 = vmatpush1.msra.mxu0 0.0
      %2857 = vmatprep.subr.mxu0 0.0
      %2858 = vmatpush1.msra.mxu0 0.0
      %2859 = vmatprep.subr.mxu0 0.0
      %2860 = vmatpush1.msra.mxu0 0.0
      %2861 = vmatprep.subr.mxu0 0.0
      %2862 = vmatpush1.msra.mxu0 0.0
      %2863 = vmatprep.subr.mxu0 0.0
      %2864 = vmatpush1.msra.mxu0 0.0
      %2865 = vmatprep.subr.mxu0 0.0
      %2866 = vmatpush1.msra.mxu0 0.0
      %2867 = vmatprep.subr.mxu0 0.0
      %2868 = vmatpush1.msra.mxu0 0.0
      %2869 = vmatprep.mubr.f32.mxu0 0.0
      %2870 = vmatmul.mubr.f32.gmra.mrb[0].mxu0 %v2800
      %v2871 = vpop.f32.mrb[0].mxu0
      %v2872 = vadd.f32 %v2798, %v2871
      %v2873 = vpop.f32.mrb[0].mxu0
      %2874 = vmatprep.mubr.f32.mxu0 0.0
      %2875 = vmatmul.mubr.f32.gmra.mrb[0].mxu0 %v2803
      %v2876 = vpop.f32.mrb[0].mxu0
      %v2877 = vadd.f32 %v2798, %v2876
      %v2878 = vpop.f32.mrb[0].mxu0
      %2879 = vdwg.mxu0
      %vm2880 = vcmask 7168
      %2881 = vst.msk [vmem:[%s170] sm:$0xff] %vm2880, %v2872
      %2882 = vst.msk [vmem:[%s170 + $0x8] sm:$0xff] %vm2880, %v2877
      %p2883 = scmp.lt.s32.totalorder %s14, 1
      %s2884 = scalar_select %p2883, %s14, 1
      %s2885 = smul.addr %s2884, 2
      %s2886 = smul.addr %s2885, 8
      %s2887 = scalar_lea.vmem %s3, %s2886
      // Predicated region
      $region33: #{stgcn_forward.1} parent=31 // pred_check
        %p2888 = pneg %p100
      $region34: #{stgcn_forward.1} parent=31 // pred_check_branch
        %2890 = sbr.rel (%p2888) target = $region36
      $region35: #{stgcn_forward.1} parent=31 // pred_region
        _
      $region36: #{stgcn_forward.1} parent=31 // pred_fallthru
        _
    $region32: #{stgcn_forward.1} parent=5 // pred_fallthru
      _
    %p2891 = scmp.le.s32.totalorder 2, %s9
    // Predicated region
    $region37: #{stgcn_forward.1} parent=5 // pred_check
      %p2892 = pneg %p2891
    $region38: #{stgcn_forward.1} parent=5 // pred_check_branch
      %2894 = sbr.rel (%p2892) target = $region40
    $region39: #{stgcn_forward.1} parent=5 // pred_region
      %s2895 = ssub.s32 %s9, 2
      // Predicated region
      $region41: #{stgcn_forward.1} parent=39 // pred_check
        %p2896 = pneg %p106
      $region42: #{stgcn_forward.1} parent=39 // pred_check_branch
        %2898 = sbr.rel (%p2896) target = $region44
      $region43: #{stgcn_forward.1} parent=39 // pred_region
        %p2899 = scmp.lt.s32.totalorder %s15, 1
        %s2900 = scalar_select %p2899, %s15, 1
        %s2901 = smul.addr %s2900, 2
        %s2902 = smul.addr %s2901, 8
        %s2903 = scalar_lea.vmem %s3, %s2902
      $region44: #{stgcn_forward.1} parent=39 // pred_fallthru
        _
    $region40: #{stgcn_forward.1} parent=5 // pred_fallthru
      _
  $region6: #{stgcn_forward.1} parent=0 // loop_footer
    %s13 = sadd.s32 1, %s9
  $region7: #{stgcn_forward.1} parent=0 // loop_footer_branch
    %8 = sbr.rel target = $region3
  $region8: #{stgcn_forward.1} parent=0 // loop_exit
    _

</llo_original>
